<compile_context>
chip_gen: v7x
topology: tpu7x:2x2x1
jax: 0.10.0
libtpu: 0.0.40
codegen_flags: <defaults>
</compile_context>

<pallas_src>
import functools
import math

import jax
import jax.numpy as jnp
from jax import lax
from jax.experimental import pallas as pl
from jax.experimental.pallas import tpu as pltpu


def _lnn_block_kernel(x_ref, h0_ref, wh_ref, wu_ref, bcat_ref, lnw_ref, lnb_ref,
                      out_ref, hfin_ref,
                      uproj_ref,
                      *, dt, lambda_res, eps, t_total, mask_tail, unroll):
    """One time-tile of the LNNBlock forward.

    x_ref:     (tT, B, H)     time-major input tile (f32, streamed)
    h0_ref:    (B, H)         initial hidden state (resident)
    wh_ref:    (H, 2H) bf16   concat([W.T, tau_w_h_w.T], axis=1)
    wu_ref:    (H, 2H) bf16   concat([U.T, tau_w_u_w.T], axis=1)
    bcat_ref:  (1, 2H) f32    concat([b, tau_w_h_b + tau_w_u_b + tau_b])
    lnw_ref / lnb_ref: (1, H) LayerNorm affine params
    out_ref:   (tT, B, H)     layer-normed outputs for this tile (streamed)
    hfin_ref:  (B, H)         final hidden state; doubles as the cross-tile carry
    uproj_ref: (tT, B, 2H) f32 VMEM scratch holding the hoisted input projection
    """
    tT, B, H = x_ref.shape

    # Seed the hidden-state carry (held in the resident output block) on tile 0.
    @pl.when(pl.program_id(0) == 0)
    def _seed():
        hfin_ref[...] = h0_ref[...]

    # Hoisted input projection: one tall (tT*B, H) @ (H, 2H) bf16 GEMM per tile,
    # f32 accumulation, constant biases folded in.  Stored to VMEM scratch so the
    # unrolled recurrence only keeps one (B, 2H) slice live per step.
    x_blk = x_ref[...]                                            # (tT, B, H) f32
    uproj_ref[...] = (
        jnp.dot(x_blk.reshape(tT * B, H).astype(jnp.bfloat16), wu_ref[...],
                preferred_element_type=jnp.float32)
        + bcat_ref[...]
    ).reshape(tT, B, 2 * H)

    wh = wh_ref[...]                                              # (H, 2H) bf16, hoisted
    ln_w = lnw_ref[...]                                           # (1, H)
    ln_b = lnb_ref[...]                                           # (1, H)
    base_t = pl.program_id(0) * tT

    def step(t, h):
        u_t = x_ref[t]                                            # (B, H) f32
        up = uproj_ref[t]                                         # (B, 2H) f32
        # Fused recurrent matmul: [h @ W.T | h @ tau_w_h_w.T], bf16 operands,
        # f32 accumulate; sliced at the lane-aligned H boundary.
        z = jnp.dot(h.astype(jnp.bfloat16), wh,
                    preferred_element_type=jnp.float32) + up
        act_in = z[:, :H]
        tau_positive = jax.nn.softplus(z[:, H:]) + 0.01
        # EUP approximate reciprocal + one Newton step (keeps recurrence drift low).
        r = pl.reciprocal(tau_positive, approx=True)
        r = r * (2.0 - tau_positive * r)
        dx = -h * r + jnp.tanh(act_in)
        if lambda_res > 0.0:
            dx = dx + lambda_res * u_t
        dx = jnp.clip(dx, -10.0, 10.0)
        h_new = h + dt * dx
        if mask_tail:
            # Padded tail steps (t_total <= global_t < T_pad) leave h untouched.
            h_new = jnp.where(base_t + t < t_total, h_new, h)

        # Fused LayerNorm(h + u); variance via E[y^2] - E[y]^2 so the two
        # cross-lane reduces are independent (XLU slot, off the VALU path).
        y = h_new + u_t
        mean = jnp.mean(y, axis=-1, keepdims=True)
        mean_sq = jnp.mean(y * y, axis=-1, keepdims=True)
        var = mean_sq - mean * mean
        out_ref[t] = (y - mean) * lax.rsqrt(var + eps) * ln_w + ln_b
        return h_new

    h = lax.fori_loop(0, tT, step, hfin_ref[...], unroll=unroll)
    hfin_ref[...] = h


def lnn_block_forward(x, h0, params, *, dt=0.2, lambda_res=0.0, eps=1e-5, block_t=32):
    """x: (B, T, H) float32, h0: (B, H) float32. Returns (out (B, T, H), h_final (B, H))."""
    B, T, H = x.shape

    # Pad batch to a multiple of 8 so (B, H) tiles fill full f32 sublane tiles.
    B_pad = max(8, ((B + 7) // 8) * 8)
    if B_pad != B:
        x = jnp.pad(x, ((0, B_pad - B), (0, 0), (0, 0)))
        h0 = jnp.pad(h0, ((0, B_pad - B), (0, 0)))

    # Time tile: pad T up to a multiple of the tile (tail masked in-kernel),
    # rather than falling back to a divisor of T.
    tT = min(block_t, T)
    n_tiles = -(-T // tT)
    T_pad = n_tiles * tT
    mask_tail = (T_pad != T)

    # TODO(synk): the (B,T,H)<->(T,B,H) transposes are extra HBM passes done by
    # XLA; drop them if the surrounding model can produce/consume time-major.
    x_tm = jnp.transpose(x, (1, 0, 2))                            # (T, B_pad, H)
    if mask_tail:
        x_tm = jnp.pad(x_tm, ((0, T_pad - T), (0, 0), (0, 0)))

    # Fuse weights (bf16 MXU operands) / pre-sum constant biases wrapper-side.
    Wh_cat = jnp.concatenate([params["W"].T, params["tau_w_h_w"].T],
                             axis=1).astype(jnp.bfloat16)          # (H, 2H)
    Wu_cat = jnp.concatenate([params["U"].T, params["tau_w_u_w"].T],
                             axis=1).astype(jnp.bfloat16)          # (H, 2H)
    b_cat = jnp.concatenate(
        [params["b"], params["tau_w_h_b"] + params["tau_w_u_b"] + params["tau_b"]]
    )[None, :].astype(jnp.float32)                                 # (1, 2H)
    ln_w = params["ln_w"][None, :].astype(jnp.float32)
    ln_b = params["ln_b"][None, :].astype(jnp.float32)

    kernel = functools.partial(
        _lnn_block_kernel, dt=dt, lambda_res=lambda_res, eps=eps,
        t_total=T, mask_tail=mask_tail, unroll=min(8, tT))

    # TODO(synk): on v7x a leading "parallel" batch-block grid axis (B_pad >= 16,
    # per-block h carry) would use the second TensorCore; single-core here.
    out_tm, h_fin = pl.pallas_call(
        kernel,
        out_shape=(
            jax.ShapeDtypeStruct((T_pad, B_pad, H), jnp.float32),
            jax.ShapeDtypeStruct((B_pad, H), jnp.float32),
        ),
        grid_spec=pltpu.PrefetchScalarGridSpec(
            num_scalar_prefetch=0,
            grid=(n_tiles,),
            in_specs=[
                pl.BlockSpec((tT, B_pad, H), lambda i: (i, 0, 0)),   # x (streamed)
                pl.BlockSpec((B_pad, H), lambda i: (0, 0)),          # h0 (resident)
                pl.BlockSpec((H, 2 * H), lambda i: (0, 0)),          # Wh_cat bf16 (resident)
                pl.BlockSpec((H, 2 * H), lambda i: (0, 0)),          # Wu_cat bf16 (resident)
                pl.BlockSpec((1, 2 * H), lambda i: (0, 0)),          # fused biases
                pl.BlockSpec((1, H), lambda i: (0, 0)),              # ln_w
                pl.BlockSpec((1, H), lambda i: (0, 0)),              # ln_b
            ],
            out_specs=(
                pl.BlockSpec((tT, B_pad, H), lambda i: (i, 0, 0)),   # out (streamed)
                pl.BlockSpec((B_pad, H), lambda i: (0, 0)),          # h_final / carry (resident)
            ),
            scratch_shapes=[
                pltpu.VMEM((tT, B_pad, 2 * H), jnp.float32),         # hoisted input projection
            ],
        ),
        compiler_params=pltpu.CompilerParams(
            dimension_semantics=("arbitrary",),                      # sequential recurrence over T
        ),
    )(x_tm, h0, Wh_cat, Wu_cat, b_cat, ln_w, ln_b)

    out = jnp.transpose(out_tm[:T], (1, 0, 2))[:B]
    return out, h_fin[:B]


def lnn_block_reference(x, h0, params, *, dt=0.2, lambda_res=0.0, eps=1e-5):
    """Pure-JAX f32 reference mirroring the PyTorch forward, for verification."""
    B, T, H = x.shape
    h = h0
    outs = []
    for t in range(T):
        u = x[:, t, :]
        tau_control = (u @ params["tau_w_u_w"].T + params["tau_w_u_b"]
                       + h @ params["tau_w_h_w"].T + params["tau_w_h_b"]
                       + params["tau_b"])
        tau_positive = jax.nn.softplus(tau_control) + 0.01
        decay = -h / tau_positive
        act = jnp.tanh(h @ params["W"].T + u @ params["U"].T + params["b"])
        dx = decay + act
        if lambda_res > 0.0:
            dx = dx + lambda_res * u
        dx = jnp.clip(dx, -10.0, 10.0)
        h = h + dt * dx
        outs.append(h)
    outputs = jnp.stack(outs, axis=1)
    y = outputs + x
    mean = y.mean(-1, keepdims=True)
    var = ((y - mean) ** 2).mean(-1, keepdims=True)
    out = (y - mean) / jnp.sqrt(var + eps) * params["ln_w"] + params["ln_b"]
    return out, h


def init_params(key, hidden_size):
    """Deterministic, shape-faithful parameter init (synthetic; not a checkpoint)."""
    H = hidden_size
    ks = jax.random.split(key, 6)
    bound = 1.0 / math.sqrt(H)
    return {
        "W": jax.nn.initializers.orthogonal()(ks[0], (H, H), jnp.float32),
        "U": jax.nn.initializers.glorot_uniform()(ks[1], (H, H), jnp.float32),
        "b": jnp.zeros((H,), jnp.float32),
        "tau_w_h_w": jax.random.uniform(ks[2], (H, H), jnp.float32, -bound, bound),
        "tau_w_h_b": jax.random.uniform(ks[3], (H,), jnp.float32, -bound, bound),
        "tau_w_u_w": jax.random.uniform(ks[4], (H, H), jnp.float32, -bound, bound),
        "tau_w_u_b": jnp.zeros((H,), jnp.float32),
        "tau_b": jax.random.uniform(ks[5], (H,), jnp.float32, -2.0, 2.0),
        "ln_w": jnp.ones((H,), jnp.float32),
        "ln_b": jnp.zeros((H,), jnp.float32),
    }


if __name__ == "__main__":
    # Small test shapes.  block_t=6 forces 3 grid steps (cross-tile hidden carry),
    # a padded tail (T=16 -> T_pad=18, masked), and the fori_loop recurrence path.
    B, T, H = 2, 16, 128
    key = jax.random.PRNGKey(0)
    k_par, k_x, k_h = jax.random.split(key, 3)

    params = init_params(k_par, H)
    x = jax.random.normal(k_x, (B, T, H), jnp.float32)
    h0 = jax.random.normal(k_h, (B, H), jnp.float32) * 0.1

    fwd = jax.jit(functools.partial(lnn_block_forward, dt=0.2, lambda_res=0.0, block_t=6))
    out, h_final = jax.block_until_ready(fwd(x, h0, params))

    out_ref, h_ref = lnn_block_reference(x, h0, params, dt=0.2, lambda_res=0.0)
    assert out.shape == (B, T, H) and h_final.shape == (B, H)
    # bf16 MXU operands (f32 accumulation) introduce small drift in the recurrence;
    # tolerance reflects that while still catching structural errors.
    assert jnp.allclose(out, out_ref, atol=3e-2, rtol=3e-2), "output mismatch vs reference"
    assert jnp.allclose(h_final, h_ref, atol=3e-2, rtol=3e-2), "hidden-state mismatch vs reference"

    print("KERNEL_OK")
</pallas_src>

<mosaic_0001>
module attributes {stable_mosaic.version = 11 : i64} {
  func.func @_lnn_block_kernel(%arg0: i32, %arg1: memref<6x8x128xf32, #tpu.memory_space<vmem>>, %arg2: memref<8x128xf32, #tpu.memory_space<vmem>>, %arg3: memref<128x256xbf16, #tpu.memory_space<vmem>>, %arg4: memref<128x256xbf16, #tpu.memory_space<vmem>>, %arg5: memref<1x256xf32, #tpu.memory_space<vmem>>, %arg6: memref<1x128xf32, #tpu.memory_space<vmem>>, %arg7: memref<1x128xf32, #tpu.memory_space<vmem>>, %arg8: memref<6x8x128xf32, #tpu.memory_space<vmem>>, %arg9: memref<8x128xf32, #tpu.memory_space<vmem>>, %arg10: memref<6x8x256xf32, #tpu.memory_space<vmem>>) attributes {dimension_semantics = [#tpu.dimension_semantics<arbitrary>], iteration_bounds = array<i64: 3>, scalar_prefetch = 0 : i64, scratch_operands = 1 : i64, tpu.core_type = #tpu.core_type<tc>, window_params = [{transform_indices = @transform_0, window_bounds = array<i64: 6, 8, 128>}, {pipeline_mode = #tpu.pipeline_mode<synchronous>, transform_indices = @transform_1, window_bounds = array<i64: 8, 128>}, {pipeline_mode = #tpu.pipeline_mode<synchronous>, transform_indices = @transform_2, window_bounds = array<i64: 128, 256>}, {pipeline_mode = #tpu.pipeline_mode<synchronous>, transform_indices = @transform_3, window_bounds = array<i64: 128, 256>}, {pipeline_mode = #tpu.pipeline_mode<synchronous>, transform_indices = @transform_4, window_bounds = array<i64: 1, 256>}, {pipeline_mode = #tpu.pipeline_mode<synchronous>, transform_indices = @transform_5, window_bounds = array<i64: 1, 128>}, {pipeline_mode = #tpu.pipeline_mode<synchronous>, transform_indices = @transform_6, window_bounds = array<i64: 1, 128>}, {transform_indices = @transform_7, window_bounds = array<i64: 6, 8, 128>}, {pipeline_mode = #tpu.pipeline_mode<synchronous>, transform_indices = @transform_8, window_bounds = array<i64: 8, 128>}]} {
    %c0_i32 = arith.constant 0 : i32
    %0 = arith.cmpi eq, %arg0, %c0_i32 : i32
    %1 = arith.extui %0 : i1 to i32
    %c0_i32_0 = arith.constant 0 : i32
    %2 = arith.cmpi ne, %1, %c0_i32_0 : i32
    scf.if %2 {
      %c0_147 = arith.constant 0 : index
      %c0_148 = arith.constant 0 : index
      %463 = vector.load %arg2[%c0_147, %c0_148] : memref<8x128xf32, #tpu.memory_space<vmem>>, vector<8x128xf32>
      %c0_149 = arith.constant 0 : index
      %c0_150 = arith.constant 0 : index
      %464 = vector.load %arg9[%c0_149, %c0_150] : memref<8x128xf32, #tpu.memory_space<vmem>>, vector<8x128xf32>
      tpu.vector_store %arg9[%c0_149, %c0_150], %463 {strides = array<i32>} : memref<8x128xf32, #tpu.memory_space<vmem>>, vector<8x128xf32>,
    } else {
    }
    %c0 = arith.constant 0 : index
    %c0_1 = arith.constant 0 : index
    %c0_2 = arith.constant 0 : index
    %3 = vector.load %arg1[%c0, %c0_1, %c0_2] : memref<6x8x128xf32, #tpu.memory_space<vmem>>, vector<6x8x128xf32>
    %4 = vector.shape_cast %3 : vector<6x8x128xf32> to vector<48x128xf32>
    %5 = arith.truncf %4 : vector<48x128xf32> to vector<48x128xbf16>
    %c0_3 = arith.constant 0 : index
    %c0_4 = arith.constant 0 : index
    %6 = vector.load %arg4[%c0_3, %c0_4] : memref<128x256xbf16, #tpu.memory_space<vmem>>, vector<128x256xbf16>
    %cst = arith.constant dense<0.000000e+00> : vector<48x256xf32>
    %7 = tpu.matmul %5, %6, %cst {dimension_numbers = #tpu.dot_dimension_numbers<[1], [0], [0], [1], [0, 0, 1, 1], [], []>} : vector<48x128xbf16>, vector<128x256xbf16>, vector<48x256xf32> -> vector<48x256xf32>
    %c0_5 = arith.constant 0 : index
    %c0_6 = arith.constant 0 : index
    %8 = vector.load %arg5[%c0_5, %c0_6] : memref<1x256xf32, #tpu.memory_space<vmem>>, vector<1x256xf32>
    %9 = vector.broadcast %8 : vector<1x256xf32> to vector<48x256xf32>
    %10 = arith.addf %7, %9 : vector<48x256xf32>
    %11 = vector.shape_cast %10 : vector<48x256xf32> to vector<6x8x256xf32>
    %c0_7 = arith.constant 0 : index
    %c0_8 = arith.constant 0 : index
    %c0_9 = arith.constant 0 : index
    %12 = vector.load %arg10[%c0_7, %c0_8, %c0_9] : memref<6x8x256xf32, #tpu.memory_space<vmem>>, vector<6x8x256xf32>
    tpu.vector_store %arg10[%c0_7, %c0_8, %c0_9], %11 {strides = array<i32>} : memref<6x8x256xf32, #tpu.memory_space<vmem>>, vector<6x8x256xf32>,
    %c0_10 = arith.constant 0 : index
    %c0_11 = arith.constant 0 : index
    %13 = vector.load %arg3[%c0_10, %c0_11] : memref<128x256xbf16, #tpu.memory_space<vmem>>, vector<128x256xbf16>
    %c0_12 = arith.constant 0 : index
    %c0_13 = arith.constant 0 : index
    %14 = vector.load %arg6[%c0_12, %c0_13] : memref<1x128xf32, #tpu.memory_space<vmem>>, vector<1x128xf32>
    %c0_14 = arith.constant 0 : index
    %c0_15 = arith.constant 0 : index
    %15 = vector.load %arg7[%c0_14, %c0_15] : memref<1x128xf32, #tpu.memory_space<vmem>>, vector<1x128xf32>
    %c6_i32 = arith.constant 6 : i32
    %16 = arith.muli %arg0, %c6_i32 : i32
    %c0_16 = arith.constant 0 : index
    %c0_17 = arith.constant 0 : index
    %17 = vector.load %arg9[%c0_16, %c0_17] : memref<8x128xf32, #tpu.memory_space<vmem>>, vector<8x128xf32>
    %c0_i32_18 = arith.constant 0 : i32
    %18 = arith.index_cast %c0_i32_18 : i32 to index
    %c0_19 = arith.constant 0 : index
    %c0_20 = arith.constant 0 : index
    %19 = vector.load %arg1[%18, %c0_19, %c0_20] : memref<6x8x128xf32, #tpu.memory_space<vmem>>, vector<1x8x128xf32>
    %20 = vector.shape_cast %19 : vector<1x8x128xf32> to vector<8x128xf32>
    %21 = arith.index_cast %c0_i32_18 : i32 to index
    %c0_21 = arith.constant 0 : index
    %c0_22 = arith.constant 0 : index
    %22 = vector.load %arg10[%21, %c0_21, %c0_22] : memref<6x8x256xf32, #tpu.memory_space<vmem>>, vector<1x8x256xf32>
    %23 = vector.shape_cast %22 : vector<1x8x256xf32> to vector<8x256xf32>
    %24 = arith.truncf %17 : vector<8x128xf32> to vector<8x128xbf16>
    %cst_23 = arith.constant dense<0.000000e+00> : vector<8x256xf32>
    %25 = tpu.matmul %24, %13, %cst_23 {dimension_numbers = #tpu.dot_dimension_numbers<[1], [0], [0], [1], [0, 0, 1, 1], [], []>} : vector<8x128xbf16>, vector<128x256xbf16>, vector<8x256xf32> -> vector<8x256xf32>
    %26 = arith.addf %25, %23 : vector<8x256xf32>
    %27 = vector.extract_strided_slice %26 {offsets = [0, 0], sizes = [8, 128], strides = [1, 1]} : vector<8x256xf32> to vector<8x128xf32>
    %28 = vector.extract_strided_slice %26 {offsets = [0, 128], sizes = [8, 128], strides = [1, 1]} : vector<8x256xf32> to vector<8x128xf32>
    %cst_24 = arith.constant 0.000000e+00 : f32
    %29 = vector.broadcast %cst_24 : f32 to vector<8x128xf32>
    %30 = arith.maximumf %28, %29 : vector<8x128xf32>
    %31 = vector.broadcast %cst_24 : f32 to vector<8x128xf32>
    %32 = arith.subf %28, %31 : vector<8x128xf32>
    %33 = arith.cmpf one, %32, %32 : vector<8x128xf32>
    %34 = vector.broadcast %cst_24 : f32 to vector<8x128xf32>
    %35 = arith.addf %28, %34 : vector<8x128xf32>
    %36 = math.absf %32 : vector<8x128xf32>
    %cst_25 = arith.constant 0.000000e+00 : f32
    %37 = vector.broadcast %cst_25 : f32 to vector<8x128xf32>
    %38 = arith.subf %37, %36 : vector<8x128xf32>
    %39 = math.exp %38 : vector<8x128xf32>
    %40 = math.log1p %39 : vector<8x128xf32>
    %41 = arith.addf %30, %40 : vector<8x128xf32>
    %42 = arith.select %33, %35, %41 : vector<8x128xi1>, vector<8x128xf32>
    %cst_26 = arith.constant 0.00999999977 : f32
    %43 = vector.broadcast %cst_26 : f32 to vector<8x128xf32>
    %44 = arith.addf %42, %43 : vector<8x128xf32>
    %45 = tpu.reciprocal %44 {approx = true} : vector<8x128xf32> -> vector<8x128xf32>
    %46 = arith.mulf %44, %45 : vector<8x128xf32>
    %cst_27 = arith.constant 2.000000e+00 : f32
    %47 = vector.broadcast %cst_27 : f32 to vector<8x128xf32>
    %48 = arith.subf %47, %46 : vector<8x128xf32>
    %49 = arith.mulf %45, %48 : vector<8x128xf32>
    %cst_28 = arith.constant 0.000000e+00 : f32
    %50 = vector.broadcast %cst_28 : f32 to vector<8x128xf32>
    %51 = arith.subf %50, %17 : vector<8x128xf32>
    %52 = arith.mulf %51, %49 : vector<8x128xf32>
    %53 = math.tanh %27 : vector<8x128xf32>
    %54 = arith.addf %52, %53 : vector<8x128xf32>
    %cst_29 = arith.constant -1.000000e+01 : f32
    %cst_30 = arith.constant 1.000000e+01 : f32
    %55 = vector.broadcast %cst_29 : f32 to vector<8x128xf32>
    %56 = arith.maximumf %55, %54 : vector<8x128xf32>
    %57 = vector.broadcast %cst_30 : f32 to vector<8x128xf32>
    %58 = arith.minimumf %57, %56 : vector<8x128xf32>
    %cst_31 = arith.constant 2.000000e-01 : f32
    %59 = vector.broadcast %cst_31 : f32 to vector<8x128xf32>
    %60 = arith.mulf %59, %58 : vector<8x128xf32>
    %61 = arith.addf %17, %60 : vector<8x128xf32>
    %62 = arith.addi %16, %c0_i32_18 : i32
    %c16_i32 = arith.constant 16 : i32
    %63 = arith.cmpi slt, %62, %c16_i32 : i32
    %64 = arith.select %63, %61, %17 : vector<8x128xf32>
    %65 = arith.addf %64, %20 : vector<8x128xf32>
    %cst_32 = arith.constant dense<0.000000e+00> : vector<8xf32>
    %66 = vector.multi_reduction <add>, %65, %cst_32 [1] : vector<8x128xf32> to vector<8xf32>
    %67 = vector.shape_cast %66 : vector<8xf32> to vector<8x1xf32>
    %cst_33 = arith.constant 1.280000e+02 : f32
    %68 = vector.broadcast %cst_33 : f32 to vector<8x1xf32>
    %69 = arith.divf %67, %68 : vector<8x1xf32>
    %70 = arith.mulf %65, %65 : vector<8x128xf32>
    %cst_34 = arith.constant dense<0.000000e+00> : vector<8xf32>
    %71 = vector.multi_reduction <add>, %70, %cst_34 [1] : vector<8x128xf32> to vector<8xf32>
    %72 = vector.shape_cast %71 : vector<8xf32> to vector<8x1xf32>
    %cst_35 = arith.constant 1.280000e+02 : f32
    %73 = vector.broadcast %cst_35 : f32 to vector<8x1xf32>
    %74 = arith.divf %72, %73 : vector<8x1xf32>
    %75 = arith.mulf %69, %69 : vector<8x1xf32>
    %76 = arith.subf %74, %75 : vector<8x1xf32>
    %77 = vector.broadcast %69 : vector<8x1xf32> to vector<8x128xf32>
    %78 = arith.subf %65, %77 : vector<8x128xf32>
    %cst_36 = arith.constant 9.99999974E-6 : f32
    %79 = vector.broadcast %cst_36 : f32 to vector<8x1xf32>
    %80 = arith.addf %76, %79 : vector<8x1xf32>
    %81 = math.rsqrt %80 : vector<8x1xf32>
    %82 = vector.broadcast %81 : vector<8x1xf32> to vector<8x128xf32>
    %83 = arith.mulf %78, %82 : vector<8x128xf32>
    %84 = vector.broadcast %14 : vector<1x128xf32> to vector<8x128xf32>
    %85 = arith.mulf %83, %84 : vector<8x128xf32>
    %86 = vector.broadcast %15 : vector<1x128xf32> to vector<8x128xf32>
    %87 = arith.addf %85, %86 : vector<8x128xf32>
    %88 = arith.index_cast %c0_i32_18 : i32 to index
    %c0_37 = arith.constant 0 : index
    %c0_38 = arith.constant 0 : index
    %89 = vector.load %arg8[%88, %c0_37, %c0_38] : memref<6x8x128xf32, #tpu.memory_space<vmem>>, vector<1x8x128xf32>
    %90 = vector.shape_cast %89 : vector<1x8x128xf32> to vector<8x128xf32>
    %91 = vector.shape_cast %87 : vector<8x128xf32> to vector<1x8x128xf32>
    tpu.vector_store %arg8[%88, %c0_37, %c0_38], %91 {strides = array<i32>} : memref<6x8x128xf32, #tpu.memory_space<vmem>>, vector<1x8x128xf32>,
    %c1_i32 = arith.constant 1 : i32
    %92 = arith.index_cast %c1_i32 : i32 to index
    %c0_39 = arith.constant 0 : index
    %c0_40 = arith.constant 0 : index
    %93 = vector.load %arg1[%92, %c0_39, %c0_40] : memref<6x8x128xf32, #tpu.memory_space<vmem>>, vector<1x8x128xf32>
    %94 = vector.shape_cast %93 : vector<1x8x128xf32> to vector<8x128xf32>
    %95 = arith.index_cast %c1_i32 : i32 to index
    %c0_41 = arith.constant 0 : index
    %c0_42 = arith.constant 0 : index
    %96 = vector.load %arg10[%95, %c0_41, %c0_42] : memref<6x8x256xf32, #tpu.memory_space<vmem>>, vector<1x8x256xf32>
    %97 = vector.shape_cast %96 : vector<1x8x256xf32> to vector<8x256xf32>
    %98 = arith.truncf %64 : vector<8x128xf32> to vector<8x128xbf16>
    %cst_43 = arith.constant dense<0.000000e+00> : vector<8x256xf32>
    %99 = tpu.matmul %98, %13, %cst_43 {dimension_numbers = #tpu.dot_dimension_numbers<[1], [0], [0], [1], [0, 0, 1, 1], [], []>} : vector<8x128xbf16>, vector<128x256xbf16>, vector<8x256xf32> -> vector<8x256xf32>
    %100 = arith.addf %99, %97 : vector<8x256xf32>
    %101 = vector.extract_strided_slice %100 {offsets = [0, 0], sizes = [8, 128], strides = [1, 1]} : vector<8x256xf32> to vector<8x128xf32>
    %102 = vector.extract_strided_slice %100 {offsets = [0, 128], sizes = [8, 128], strides = [1, 1]} : vector<8x256xf32> to vector<8x128xf32>
    %cst_44 = arith.constant 0.000000e+00 : f32
    %103 = vector.broadcast %cst_44 : f32 to vector<8x128xf32>
    %104 = arith.maximumf %102, %103 : vector<8x128xf32>
    %105 = vector.broadcast %cst_44 : f32 to vector<8x128xf32>
    %106 = arith.subf %102, %105 : vector<8x128xf32>
    %107 = arith.cmpf one, %106, %106 : vector<8x128xf32>
    %108 = vector.broadcast %cst_44 : f32 to vector<8x128xf32>
    %109 = arith.addf %102, %108 : vector<8x128xf32>
    %110 = math.absf %106 : vector<8x128xf32>
    %cst_45 = arith.constant 0.000000e+00 : f32
    %111 = vector.broadcast %cst_45 : f32 to vector<8x128xf32>
    %112 = arith.subf %111, %110 : vector<8x128xf32>
    %113 = math.exp %112 : vector<8x128xf32>
    %114 = math.log1p %113 : vector<8x128xf32>
    %115 = arith.addf %104, %114 : vector<8x128xf32>
    %116 = arith.select %107, %109, %115 : vector<8x128xi1>, vector<8x128xf32>
    %cst_46 = arith.constant 0.00999999977 : f32
    %117 = vector.broadcast %cst_46 : f32 to vector<8x128xf32>
    %118 = arith.addf %116, %117 : vector<8x128xf32>
    %119 = tpu.reciprocal %118 {approx = true} : vector<8x128xf32> -> vector<8x128xf32>
    %120 = arith.mulf %118, %119 : vector<8x128xf32>
    %cst_47 = arith.constant 2.000000e+00 : f32
    %121 = vector.broadcast %cst_47 : f32 to vector<8x128xf32>
    %122 = arith.subf %121, %120 : vector<8x128xf32>
    %123 = arith.mulf %119, %122 : vector<8x128xf32>
    %cst_48 = arith.constant 0.000000e+00 : f32
    %124 = vector.broadcast %cst_48 : f32 to vector<8x128xf32>
    %125 = arith.subf %124, %64 : vector<8x128xf32>
    %126 = arith.mulf %125, %123 : vector<8x128xf32>
    %127 = math.tanh %101 : vector<8x128xf32>
    %128 = arith.addf %126, %127 : vector<8x128xf32>
    %cst_49 = arith.constant -1.000000e+01 : f32
    %cst_50 = arith.constant 1.000000e+01 : f32
    %129 = vector.broadcast %cst_49 : f32 to vector<8x128xf32>
    %130 = arith.maximumf %129, %128 : vector<8x128xf32>
    %131 = vector.broadcast %cst_50 : f32 to vector<8x128xf32>
    %132 = arith.minimumf %131, %130 : vector<8x128xf32>
    %cst_51 = arith.constant 2.000000e-01 : f32
    %133 = vector.broadcast %cst_51 : f32 to vector<8x128xf32>
    %134 = arith.mulf %133, %132 : vector<8x128xf32>
    %135 = arith.addf %64, %134 : vector<8x128xf32>
    %136 = arith.addi %16, %c1_i32 : i32
    %c16_i32_52 = arith.constant 16 : i32
    %137 = arith.cmpi slt, %136, %c16_i32_52 : i32
    %138 = arith.select %137, %135, %64 : vector<8x128xf32>
    %139 = arith.addf %138, %94 : vector<8x128xf32>
    %cst_53 = arith.constant dense<0.000000e+00> : vector<8xf32>
    %140 = vector.multi_reduction <add>, %139, %cst_53 [1] : vector<8x128xf32> to vector<8xf32>
    %141 = vector.shape_cast %140 : vector<8xf32> to vector<8x1xf32>
    %cst_54 = arith.constant 1.280000e+02 : f32
    %142 = vector.broadcast %cst_54 : f32 to vector<8x1xf32>
    %143 = arith.divf %141, %142 : vector<8x1xf32>
    %144 = arith.mulf %139, %139 : vector<8x128xf32>
    %cst_55 = arith.constant dense<0.000000e+00> : vector<8xf32>
    %145 = vector.multi_reduction <add>, %144, %cst_55 [1] : vector<8x128xf32> to vector<8xf32>
    %146 = vector.shape_cast %145 : vector<8xf32> to vector<8x1xf32>
    %cst_56 = arith.constant 1.280000e+02 : f32
    %147 = vector.broadcast %cst_56 : f32 to vector<8x1xf32>
    %148 = arith.divf %146, %147 : vector<8x1xf32>
    %149 = arith.mulf %143, %143 : vector<8x1xf32>
    %150 = arith.subf %148, %149 : vector<8x1xf32>
    %151 = vector.broadcast %143 : vector<8x1xf32> to vector<8x128xf32>
    %152 = arith.subf %139, %151 : vector<8x128xf32>
    %cst_57 = arith.constant 9.99999974E-6 : f32
    %153 = vector.broadcast %cst_57 : f32 to vector<8x1xf32>
    %154 = arith.addf %150, %153 : vector<8x1xf32>
    %155 = math.rsqrt %154 : vector<8x1xf32>
    %156 = vector.broadcast %155 : vector<8x1xf32> to vector<8x128xf32>
    %157 = arith.mulf %152, %156 : vector<8x128xf32>
    %158 = vector.broadcast %14 : vector<1x128xf32> to vector<8x128xf32>
    %159 = arith.mulf %157, %158 : vector<8x128xf32>
    %160 = vector.broadcast %15 : vector<1x128xf32> to vector<8x128xf32>
    %161 = arith.addf %159, %160 : vector<8x128xf32>
    %162 = arith.index_cast %c1_i32 : i32 to index
    %c0_58 = arith.constant 0 : index
    %c0_59 = arith.constant 0 : index
    %163 = vector.load %arg8[%162, %c0_58, %c0_59] : memref<6x8x128xf32, #tpu.memory_space<vmem>>, vector<1x8x128xf32>
    %164 = vector.shape_cast %163 : vector<1x8x128xf32> to vector<8x128xf32>
    %165 = vector.shape_cast %161 : vector<8x128xf32> to vector<1x8x128xf32>
    tpu.vector_store %arg8[%162, %c0_58, %c0_59], %165 {strides = array<i32>} : memref<6x8x128xf32, #tpu.memory_space<vmem>>, vector<1x8x128xf32>,
    %c2_i32 = arith.constant 2 : i32
    %166 = arith.index_cast %c2_i32 : i32 to index
    %c0_60 = arith.constant 0 : index
    %c0_61 = arith.constant 0 : index
    %167 = vector.load %arg1[%166, %c0_60, %c0_61] : memref<6x8x128xf32, #tpu.memory_space<vmem>>, vector<1x8x128xf32>
    %168 = vector.shape_cast %167 : vector<1x8x128xf32> to vector<8x128xf32>
    %169 = arith.index_cast %c2_i32 : i32 to index
    %c0_62 = arith.constant 0 : index
    %c0_63 = arith.constant 0 : index
    %170 = vector.load %arg10[%169, %c0_62, %c0_63] : memref<6x8x256xf32, #tpu.memory_space<vmem>>, vector<1x8x256xf32>
    %171 = vector.shape_cast %170 : vector<1x8x256xf32> to vector<8x256xf32>
    %172 = arith.truncf %138 : vector<8x128xf32> to vector<8x128xbf16>
    %cst_64 = arith.constant dense<0.000000e+00> : vector<8x256xf32>
    %173 = tpu.matmul %172, %13, %cst_64 {dimension_numbers = #tpu.dot_dimension_numbers<[1], [0], [0], [1], [0, 0, 1, 1], [], []>} : vector<8x128xbf16>, vector<128x256xbf16>, vector<8x256xf32> -> vector<8x256xf32>
    %174 = arith.addf %173, %171 : vector<8x256xf32>
    %175 = vector.extract_strided_slice %174 {offsets = [0, 0], sizes = [8, 128], strides = [1, 1]} : vector<8x256xf32> to vector<8x128xf32>
    %176 = vector.extract_strided_slice %174 {offsets = [0, 128], sizes = [8, 128], strides = [1, 1]} : vector<8x256xf32> to vector<8x128xf32>
    %cst_65 = arith.constant 0.000000e+00 : f32
    %177 = vector.broadcast %cst_65 : f32 to vector<8x128xf32>
    %178 = arith.maximumf %176, %177 : vector<8x128xf32>
    %179 = vector.broadcast %cst_65 : f32 to vector<8x128xf32>
    %180 = arith.subf %176, %179 : vector<8x128xf32>
    %181 = arith.cmpf one, %180, %180 : vector<8x128xf32>
    %182 = vector.broadcast %cst_65 : f32 to vector<8x128xf32>
    %183 = arith.addf %176, %182 : vector<8x128xf32>
    %184 = math.absf %180 : vector<8x128xf32>
    %cst_66 = arith.constant 0.000000e+00 : f32
    %185 = vector.broadcast %cst_66 : f32 to vector<8x128xf32>
    %186 = arith.subf %185, %184 : vector<8x128xf32>
    %187 = math.exp %186 : vector<8x128xf32>
    %188 = math.log1p %187 : vector<8x128xf32>
    %189 = arith.addf %178, %188 : vector<8x128xf32>
    %190 = arith.select %181, %183, %189 : vector<8x128xi1>, vector<8x128xf32>
    %cst_67 = arith.constant 0.00999999977 : f32
    %191 = vector.broadcast %cst_67 : f32 to vector<8x128xf32>
    %192 = arith.addf %190, %191 : vector<8x128xf32>
    %193 = tpu.reciprocal %192 {approx = true} : vector<8x128xf32> -> vector<8x128xf32>
    %194 = arith.mulf %192, %193 : vector<8x128xf32>
    %cst_68 = arith.constant 2.000000e+00 : f32
    %195 = vector.broadcast %cst_68 : f32 to vector<8x128xf32>
    %196 = arith.subf %195, %194 : vector<8x128xf32>
    %197 = arith.mulf %193, %196 : vector<8x128xf32>
    %cst_69 = arith.constant 0.000000e+00 : f32
    %198 = vector.broadcast %cst_69 : f32 to vector<8x128xf32>
    %199 = arith.subf %198, %138 : vector<8x128xf32>
    %200 = arith.mulf %199, %197 : vector<8x128xf32>
    %201 = math.tanh %175 : vector<8x128xf32>
    %202 = arith.addf %200, %201 : vector<8x128xf32>
    %cst_70 = arith.constant -1.000000e+01 : f32
    %cst_71 = arith.constant 1.000000e+01 : f32
    %203 = vector.broadcast %cst_70 : f32 to vector<8x128xf32>
    %204 = arith.maximumf %203, %202 : vector<8x128xf32>
    %205 = vector.broadcast %cst_71 : f32 to vector<8x128xf32>
    %206 = arith.minimumf %205, %204 : vector<8x128xf32>
    %cst_72 = arith.constant 2.000000e-01 : f32
    %207 = vector.broadcast %cst_72 : f32 to vector<8x128xf32>
    %208 = arith.mulf %207, %206 : vector<8x128xf32>
    %209 = arith.addf %138, %208 : vector<8x128xf32>
    %210 = arith.addi %16, %c2_i32 : i32
    %c16_i32_73 = arith.constant 16 : i32
    %211 = arith.cmpi slt, %210, %c16_i32_73 : i32
    %212 = arith.select %211, %209, %138 : vector<8x128xf32>
    %213 = arith.addf %212, %168 : vector<8x128xf32>
    %cst_74 = arith.constant dense<0.000000e+00> : vector<8xf32>
    %214 = vector.multi_reduction <add>, %213, %cst_74 [1] : vector<8x128xf32> to vector<8xf32>
    %215 = vector.shape_cast %214 : vector<8xf32> to vector<8x1xf32>
    %cst_75 = arith.constant 1.280000e+02 : f32
    %216 = vector.broadcast %cst_75 : f32 to vector<8x1xf32>
    %217 = arith.divf %215, %216 : vector<8x1xf32>
    %218 = arith.mulf %213, %213 : vector<8x128xf32>
    %cst_76 = arith.constant dense<0.000000e+00> : vector<8xf32>
    %219 = vector.multi_reduction <add>, %218, %cst_76 [1] : vector<8x128xf32> to vector<8xf32>
    %220 = vector.shape_cast %219 : vector<8xf32> to vector<8x1xf32>
    %cst_77 = arith.constant 1.280000e+02 : f32
    %221 = vector.broadcast %cst_77 : f32 to vector<8x1xf32>
    %222 = arith.divf %220, %221 : vector<8x1xf32>
    %223 = arith.mulf %217, %217 : vector<8x1xf32>
    %224 = arith.subf %222, %223 : vector<8x1xf32>
    %225 = vector.broadcast %217 : vector<8x1xf32> to vector<8x128xf32>
    %226 = arith.subf %213, %225 : vector<8x128xf32>
    %cst_78 = arith.constant 9.99999974E-6 : f32
    %227 = vector.broadcast %cst_78 : f32 to vector<8x1xf32>
    %228 = arith.addf %224, %227 : vector<8x1xf32>
    %229 = math.rsqrt %228 : vector<8x1xf32>
    %230 = vector.broadcast %229 : vector<8x1xf32> to vector<8x128xf32>
    %231 = arith.mulf %226, %230 : vector<8x128xf32>
    %232 = vector.broadcast %14 : vector<1x128xf32> to vector<8x128xf32>
    %233 = arith.mulf %231, %232 : vector<8x128xf32>
    %234 = vector.broadcast %15 : vector<1x128xf32> to vector<8x128xf32>
    %235 = arith.addf %233, %234 : vector<8x128xf32>
    %236 = arith.index_cast %c2_i32 : i32 to index
    %c0_79 = arith.constant 0 : index
    %c0_80 = arith.constant 0 : index
    %237 = vector.load %arg8[%236, %c0_79, %c0_80] : memref<6x8x128xf32, #tpu.memory_space<vmem>>, vector<1x8x128xf32>
    %238 = vector.shape_cast %237 : vector<1x8x128xf32> to vector<8x128xf32>
    %239 = vector.shape_cast %235 : vector<8x128xf32> to vector<1x8x128xf32>
    tpu.vector_store %arg8[%236, %c0_79, %c0_80], %239 {strides = array<i32>} : memref<6x8x128xf32, #tpu.memory_space<vmem>>, vector<1x8x128xf32>,
    %c3_i32 = arith.constant 3 : i32
    %240 = arith.index_cast %c3_i32 : i32 to index
    %c0_81 = arith.constant 0 : index
    %c0_82 = arith.constant 0 : index
    %241 = vector.load %arg1[%240, %c0_81, %c0_82] : memref<6x8x128xf32, #tpu.memory_space<vmem>>, vector<1x8x128xf32>
    %242 = vector.shape_cast %241 : vector<1x8x128xf32> to vector<8x128xf32>
    %243 = arith.index_cast %c3_i32 : i32 to index
    %c0_83 = arith.constant 0 : index
    %c0_84 = arith.constant 0 : index
    %244 = vector.load %arg10[%243, %c0_83, %c0_84] : memref<6x8x256xf32, #tpu.memory_space<vmem>>, vector<1x8x256xf32>
    %245 = vector.shape_cast %244 : vector<1x8x256xf32> to vector<8x256xf32>
    %246 = arith.truncf %212 : vector<8x128xf32> to vector<8x128xbf16>
    %cst_85 = arith.constant dense<0.000000e+00> : vector<8x256xf32>
    %247 = tpu.matmul %246, %13, %cst_85 {dimension_numbers = #tpu.dot_dimension_numbers<[1], [0], [0], [1], [0, 0, 1, 1], [], []>} : vector<8x128xbf16>, vector<128x256xbf16>, vector<8x256xf32> -> vector<8x256xf32>
    %248 = arith.addf %247, %245 : vector<8x256xf32>
    %249 = vector.extract_strided_slice %248 {offsets = [0, 0], sizes = [8, 128], strides = [1, 1]} : vector<8x256xf32> to vector<8x128xf32>
    %250 = vector.extract_strided_slice %248 {offsets = [0, 128], sizes = [8, 128], strides = [1, 1]} : vector<8x256xf32> to vector<8x128xf32>
    %cst_86 = arith.constant 0.000000e+00 : f32
    %251 = vector.broadcast %cst_86 : f32 to vector<8x128xf32>
    %252 = arith.maximumf %250, %251 : vector<8x128xf32>
    %253 = vector.broadcast %cst_86 : f32 to vector<8x128xf32>
    %254 = arith.subf %250, %253 : vector<8x128xf32>
    %255 = arith.cmpf one, %254, %254 : vector<8x128xf32>
    %256 = vector.broadcast %cst_86 : f32 to vector<8x128xf32>
    %257 = arith.addf %250, %256 : vector<8x128xf32>
    %258 = math.absf %254 : vector<8x128xf32>
    %cst_87 = arith.constant 0.000000e+00 : f32
    %259 = vector.broadcast %cst_87 : f32 to vector<8x128xf32>
    %260 = arith.subf %259, %258 : vector<8x128xf32>
    %261 = math.exp %260 : vector<8x128xf32>
    %262 = math.log1p %261 : vector<8x128xf32>
    %263 = arith.addf %252, %262 : vector<8x128xf32>
    %264 = arith.select %255, %257, %263 : vector<8x128xi1>, vector<8x128xf32>
    %cst_88 = arith.constant 0.00999999977 : f32
    %265 = vector.broadcast %cst_88 : f32 to vector<8x128xf32>
    %266 = arith.addf %264, %265 : vector<8x128xf32>
    %267 = tpu.reciprocal %266 {approx = true} : vector<8x128xf32> -> vector<8x128xf32>
    %268 = arith.mulf %266, %267 : vector<8x128xf32>
    %cst_89 = arith.constant 2.000000e+00 : f32
    %269 = vector.broadcast %cst_89 : f32 to vector<8x128xf32>
    %270 = arith.subf %269, %268 : vector<8x128xf32>
    %271 = arith.mulf %267, %270 : vector<8x128xf32>
    %cst_90 = arith.constant 0.000000e+00 : f32
    %272 = vector.broadcast %cst_90 : f32 to vector<8x128xf32>
    %273 = arith.subf %272, %212 : vector<8x128xf32>
    %274 = arith.mulf %273, %271 : vector<8x128xf32>
    %275 = math.tanh %249 : vector<8x128xf32>
    %276 = arith.addf %274, %275 : vector<8x128xf32>
    %cst_91 = arith.constant -1.000000e+01 : f32
    %cst_92 = arith.constant 1.000000e+01 : f32
    %277 = vector.broadcast %cst_91 : f32 to vector<8x128xf32>
    %278 = arith.maximumf %277, %276 : vector<8x128xf32>
    %279 = vector.broadcast %cst_92 : f32 to vector<8x128xf32>
    %280 = arith.minimumf %279, %278 : vector<8x128xf32>
    %cst_93 = arith.constant 2.000000e-01 : f32
    %281 = vector.broadcast %cst_93 : f32 to vector<8x128xf32>
    %282 = arith.mulf %281, %280 : vector<8x128xf32>
    %283 = arith.addf %212, %282 : vector<8x128xf32>
    %284 = arith.addi %16, %c3_i32 : i32
    %c16_i32_94 = arith.constant 16 : i32
    %285 = arith.cmpi slt, %284, %c16_i32_94 : i32
    %286 = arith.select %285, %283, %212 : vector<8x128xf32>
    %287 = arith.addf %286, %242 : vector<8x128xf32>
    %cst_95 = arith.constant dense<0.000000e+00> : vector<8xf32>
    %288 = vector.multi_reduction <add>, %287, %cst_95 [1] : vector<8x128xf32> to vector<8xf32>
    %289 = vector.shape_cast %288 : vector<8xf32> to vector<8x1xf32>
    %cst_96 = arith.constant 1.280000e+02 : f32
    %290 = vector.broadcast %cst_96 : f32 to vector<8x1xf32>
    %291 = arith.divf %289, %290 : vector<8x1xf32>
    %292 = arith.mulf %287, %287 : vector<8x128xf32>
    %cst_97 = arith.constant dense<0.000000e+00> : vector<8xf32>
    %293 = vector.multi_reduction <add>, %292, %cst_97 [1] : vector<8x128xf32> to vector<8xf32>
    %294 = vector.shape_cast %293 : vector<8xf32> to vector<8x1xf32>
    %cst_98 = arith.constant 1.280000e+02 : f32
    %295 = vector.broadcast %cst_98 : f32 to vector<8x1xf32>
    %296 = arith.divf %294, %295 : vector<8x1xf32>
    %297 = arith.mulf %291, %291 : vector<8x1xf32>
    %298 = arith.subf %296, %297 : vector<8x1xf32>
    %299 = vector.broadcast %291 : vector<8x1xf32> to vector<8x128xf32>
    %300 = arith.subf %287, %299 : vector<8x128xf32>
    %cst_99 = arith.constant 9.99999974E-6 : f32
    %301 = vector.broadcast %cst_99 : f32 to vector<8x1xf32>
    %302 = arith.addf %298, %301 : vector<8x1xf32>
    %303 = math.rsqrt %302 : vector<8x1xf32>
    %304 = vector.broadcast %303 : vector<8x1xf32> to vector<8x128xf32>
    %305 = arith.mulf %300, %304 : vector<8x128xf32>
    %306 = vector.broadcast %14 : vector<1x128xf32> to vector<8x128xf32>
    %307 = arith.mulf %305, %306 : vector<8x128xf32>
    %308 = vector.broadcast %15 : vector<1x128xf32> to vector<8x128xf32>
    %309 = arith.addf %307, %308 : vector<8x128xf32>
    %310 = arith.index_cast %c3_i32 : i32 to index
    %c0_100 = arith.constant 0 : index
    %c0_101 = arith.constant 0 : index
    %311 = vector.load %arg8[%310, %c0_100, %c0_101] : memref<6x8x128xf32, #tpu.memory_space<vmem>>, vector<1x8x128xf32>
    %312 = vector.shape_cast %311 : vector<1x8x128xf32> to vector<8x128xf32>
    %313 = vector.shape_cast %309 : vector<8x128xf32> to vector<1x8x128xf32>
    tpu.vector_store %arg8[%310, %c0_100, %c0_101], %313 {strides = array<i32>} : memref<6x8x128xf32, #tpu.memory_space<vmem>>, vector<1x8x128xf32>,
    %c4_i32 = arith.constant 4 : i32
    %314 = arith.index_cast %c4_i32 : i32 to index
    %c0_102 = arith.constant 0 : index
    %c0_103 = arith.constant 0 : index
    %315 = vector.load %arg1[%314, %c0_102, %c0_103] : memref<6x8x128xf32, #tpu.memory_space<vmem>>, vector<1x8x128xf32>
    %316 = vector.shape_cast %315 : vector<1x8x128xf32> to vector<8x128xf32>
    %317 = arith.index_cast %c4_i32 : i32 to index
    %c0_104 = arith.constant 0 : index
    %c0_105 = arith.constant 0 : index
    %318 = vector.load %arg10[%317, %c0_104, %c0_105] : memref<6x8x256xf32, #tpu.memory_space<vmem>>, vector<1x8x256xf32>
    %319 = vector.shape_cast %318 : vector<1x8x256xf32> to vector<8x256xf32>
    %320 = arith.truncf %286 : vector<8x128xf32> to vector<8x128xbf16>
    %cst_106 = arith.constant dense<0.000000e+00> : vector<8x256xf32>
    %321 = tpu.matmul %320, %13, %cst_106 {dimension_numbers = #tpu.dot_dimension_numbers<[1], [0], [0], [1], [0, 0, 1, 1], [], []>} : vector<8x128xbf16>, vector<128x256xbf16>, vector<8x256xf32> -> vector<8x256xf32>
    %322 = arith.addf %321, %319 : vector<8x256xf32>
    %323 = vector.extract_strided_slice %322 {offsets = [0, 0], sizes = [8, 128], strides = [1, 1]} : vector<8x256xf32> to vector<8x128xf32>
    %324 = vector.extract_strided_slice %322 {offsets = [0, 128], sizes = [8, 128], strides = [1, 1]} : vector<8x256xf32> to vector<8x128xf32>
    %cst_107 = arith.constant 0.000000e+00 : f32
    %325 = vector.broadcast %cst_107 : f32 to vector<8x128xf32>
    %326 = arith.maximumf %324, %325 : vector<8x128xf32>
    %327 = vector.broadcast %cst_107 : f32 to vector<8x128xf32>
    %328 = arith.subf %324, %327 : vector<8x128xf32>
    %329 = arith.cmpf one, %328, %328 : vector<8x128xf32>
    %330 = vector.broadcast %cst_107 : f32 to vector<8x128xf32>
    %331 = arith.addf %324, %330 : vector<8x128xf32>
    %332 = math.absf %328 : vector<8x128xf32>
    %cst_108 = arith.constant 0.000000e+00 : f32
    %333 = vector.broadcast %cst_108 : f32 to vector<8x128xf32>
    %334 = arith.subf %333, %332 : vector<8x128xf32>
    %335 = math.exp %334 : vector<8x128xf32>
    %336 = math.log1p %335 : vector<8x128xf32>
    %337 = arith.addf %326, %336 : vector<8x128xf32>
    %338 = arith.select %329, %331, %337 : vector<8x128xi1>, vector<8x128xf32>
    %cst_109 = arith.constant 0.00999999977 : f32
    %339 = vector.broadcast %cst_109 : f32 to vector<8x128xf32>
    %340 = arith.addf %338, %339 : vector<8x128xf32>
    %341 = tpu.reciprocal %340 {approx = true} : vector<8x128xf32> -> vector<8x128xf32>
    %342 = arith.mulf %340, %341 : vector<8x128xf32>
    %cst_110 = arith.constant 2.000000e+00 : f32
    %343 = vector.broadcast %cst_110 : f32 to vector<8x128xf32>
    %344 = arith.subf %343, %342 : vector<8x128xf32>
    %345 = arith.mulf %341, %344 : vector<8x128xf32>
    %cst_111 = arith.constant 0.000000e+00 : f32
    %346 = vector.broadcast %cst_111 : f32 to vector<8x128xf32>
    %347 = arith.subf %346, %286 : vector<8x128xf32>
    %348 = arith.mulf %347, %345 : vector<8x128xf32>
    %349 = math.tanh %323 : vector<8x128xf32>
    %350 = arith.addf %348, %349 : vector<8x128xf32>
    %cst_112 = arith.constant -1.000000e+01 : f32
    %cst_113 = arith.constant 1.000000e+01 : f32
    %351 = vector.broadcast %cst_112 : f32 to vector<8x128xf32>
    %352 = arith.maximumf %351, %350 : vector<8x128xf32>
    %353 = vector.broadcast %cst_113 : f32 to vector<8x128xf32>
    %354 = arith.minimumf %353, %352 : vector<8x128xf32>
    %cst_114 = arith.constant 2.000000e-01 : f32
    %355 = vector.broadcast %cst_114 : f32 to vector<8x128xf32>
    %356 = arith.mulf %355, %354 : vector<8x128xf32>
    %357 = arith.addf %286, %356 : vector<8x128xf32>
    %358 = arith.addi %16, %c4_i32 : i32
    %c16_i32_115 = arith.constant 16 : i32
    %359 = arith.cmpi slt, %358, %c16_i32_115 : i32
    %360 = arith.select %359, %357, %286 : vector<8x128xf32>
    %361 = arith.addf %360, %316 : vector<8x128xf32>
    %cst_116 = arith.constant dense<0.000000e+00> : vector<8xf32>
    %362 = vector.multi_reduction <add>, %361, %cst_116 [1] : vector<8x128xf32> to vector<8xf32>
    %363 = vector.shape_cast %362 : vector<8xf32> to vector<8x1xf32>
    %cst_117 = arith.constant 1.280000e+02 : f32
    %364 = vector.broadcast %cst_117 : f32 to vector<8x1xf32>
    %365 = arith.divf %363, %364 : vector<8x1xf32>
    %366 = arith.mulf %361, %361 : vector<8x128xf32>
    %cst_118 = arith.constant dense<0.000000e+00> : vector<8xf32>
    %367 = vector.multi_reduction <add>, %366, %cst_118 [1] : vector<8x128xf32> to vector<8xf32>
    %368 = vector.shape_cast %367 : vector<8xf32> to vector<8x1xf32>
    %cst_119 = arith.constant 1.280000e+02 : f32
    %369 = vector.broadcast %cst_119 : f32 to vector<8x1xf32>
    %370 = arith.divf %368, %369 : vector<8x1xf32>
    %371 = arith.mulf %365, %365 : vector<8x1xf32>
    %372 = arith.subf %370, %371 : vector<8x1xf32>
    %373 = vector.broadcast %365 : vector<8x1xf32> to vector<8x128xf32>
    %374 = arith.subf %361, %373 : vector<8x128xf32>
    %cst_120 = arith.constant 9.99999974E-6 : f32
    %375 = vector.broadcast %cst_120 : f32 to vector<8x1xf32>
    %376 = arith.addf %372, %375 : vector<8x1xf32>
    %377 = math.rsqrt %376 : vector<8x1xf32>
    %378 = vector.broadcast %377 : vector<8x1xf32> to vector<8x128xf32>
    %379 = arith.mulf %374, %378 : vector<8x128xf32>
    %380 = vector.broadcast %14 : vector<1x128xf32> to vector<8x128xf32>
    %381 = arith.mulf %379, %380 : vector<8x128xf32>
    %382 = vector.broadcast %15 : vector<1x128xf32> to vector<8x128xf32>
    %383 = arith.addf %381, %382 : vector<8x128xf32>
    %384 = arith.index_cast %c4_i32 : i32 to index
    %c0_121 = arith.constant 0 : index
    %c0_122 = arith.constant 0 : index
    %385 = vector.load %arg8[%384, %c0_121, %c0_122] : memref<6x8x128xf32, #tpu.memory_space<vmem>>, vector<1x8x128xf32>
    %386 = vector.shape_cast %385 : vector<1x8x128xf32> to vector<8x128xf32>
    %387 = vector.shape_cast %383 : vector<8x128xf32> to vector<1x8x128xf32>
    tpu.vector_store %arg8[%384, %c0_121, %c0_122], %387 {strides = array<i32>} : memref<6x8x128xf32, #tpu.memory_space<vmem>>, vector<1x8x128xf32>,
    %c5_i32 = arith.constant 5 : i32
    %388 = arith.index_cast %c5_i32 : i32 to index
    %c0_123 = arith.constant 0 : index
    %c0_124 = arith.constant 0 : index
    %389 = vector.load %arg1[%388, %c0_123, %c0_124] : memref<6x8x128xf32, #tpu.memory_space<vmem>>, vector<1x8x128xf32>
    %390 = vector.shape_cast %389 : vector<1x8x128xf32> to vector<8x128xf32>
    %391 = arith.index_cast %c5_i32 : i32 to index
    %c0_125 = arith.constant 0 : index
    %c0_126 = arith.constant 0 : index
    %392 = vector.load %arg10[%391, %c0_125, %c0_126] : memref<6x8x256xf32, #tpu.memory_space<vmem>>, vector<1x8x256xf32>
    %393 = vector.shape_cast %392 : vector<1x8x256xf32> to vector<8x256xf32>
    %394 = arith.truncf %360 : vector<8x128xf32> to vector<8x128xbf16>
    %cst_127 = arith.constant dense<0.000000e+00> : vector<8x256xf32>
    %395 = tpu.matmul %394, %13, %cst_127 {dimension_numbers = #tpu.dot_dimension_numbers<[1], [0], [0], [1], [0, 0, 1, 1], [], []>} : vector<8x128xbf16>, vector<128x256xbf16>, vector<8x256xf32> -> vector<8x256xf32>
    %396 = arith.addf %395, %393 : vector<8x256xf32>
    %397 = vector.extract_strided_slice %396 {offsets = [0, 0], sizes = [8, 128], strides = [1, 1]} : vector<8x256xf32> to vector<8x128xf32>
    %398 = vector.extract_strided_slice %396 {offsets = [0, 128], sizes = [8, 128], strides = [1, 1]} : vector<8x256xf32> to vector<8x128xf32>
    %cst_128 = arith.constant 0.000000e+00 : f32
    %399 = vector.broadcast %cst_128 : f32 to vector<8x128xf32>
    %400 = arith.maximumf %398, %399 : vector<8x128xf32>
    %401 = vector.broadcast %cst_128 : f32 to vector<8x128xf32>
    %402 = arith.subf %398, %401 : vector<8x128xf32>
    %403 = arith.cmpf one, %402, %402 : vector<8x128xf32>
    %404 = vector.broadcast %cst_128 : f32 to vector<8x128xf32>
    %405 = arith.addf %398, %404 : vector<8x128xf32>
    %406 = math.absf %402 : vector<8x128xf32>
    %cst_129 = arith.constant 0.000000e+00 : f32
    %407 = vector.broadcast %cst_129 : f32 to vector<8x128xf32>
    %408 = arith.subf %407, %406 : vector<8x128xf32>
    %409 = math.exp %408 : vector<8x128xf32>
    %410 = math.log1p %409 : vector<8x128xf32>
    %411 = arith.addf %400, %410 : vector<8x128xf32>
    %412 = arith.select %403, %405, %411 : vector<8x128xi1>, vector<8x128xf32>
    %cst_130 = arith.constant 0.00999999977 : f32
    %413 = vector.broadcast %cst_130 : f32 to vector<8x128xf32>
    %414 = arith.addf %412, %413 : vector<8x128xf32>
    %415 = tpu.reciprocal %414 {approx = true} : vector<8x128xf32> -> vector<8x128xf32>
    %416 = arith.mulf %414, %415 : vector<8x128xf32>
    %cst_131 = arith.constant 2.000000e+00 : f32
    %417 = vector.broadcast %cst_131 : f32 to vector<8x128xf32>
    %418 = arith.subf %417, %416 : vector<8x128xf32>
    %419 = arith.mulf %415, %418 : vector<8x128xf32>
    %cst_132 = arith.constant 0.000000e+00 : f32
    %420 = vector.broadcast %cst_132 : f32 to vector<8x128xf32>
    %421 = arith.subf %420, %360 : vector<8x128xf32>
    %422 = arith.mulf %421, %419 : vector<8x128xf32>
    %423 = math.tanh %397 : vector<8x128xf32>
    %424 = arith.addf %422, %423 : vector<8x128xf32>
    %cst_133 = arith.constant -1.000000e+01 : f32
    %cst_134 = arith.constant 1.000000e+01 : f32
    %425 = vector.broadcast %cst_133 : f32 to vector<8x128xf32>
    %426 = arith.maximumf %425, %424 : vector<8x128xf32>
    %427 = vector.broadcast %cst_134 : f32 to vector<8x128xf32>
    %428 = arith.minimumf %427, %426 : vector<8x128xf32>
    %cst_135 = arith.constant 2.000000e-01 : f32
    %429 = vector.broadcast %cst_135 : f32 to vector<8x128xf32>
    %430 = arith.mulf %429, %428 : vector<8x128xf32>
    %431 = arith.addf %360, %430 : vector<8x128xf32>
    %432 = arith.addi %16, %c5_i32 : i32
    %c16_i32_136 = arith.constant 16 : i32
    %433 = arith.cmpi slt, %432, %c16_i32_136 : i32
    %434 = arith.select %433, %431, %360 : vector<8x128xf32>
    %435 = arith.addf %434, %390 : vector<8x128xf32>
    %cst_137 = arith.constant dense<0.000000e+00> : vector<8xf32>
    %436 = vector.multi_reduction <add>, %435, %cst_137 [1] : vector<8x128xf32> to vector<8xf32>
    %437 = vector.shape_cast %436 : vector<8xf32> to vector<8x1xf32>
    %cst_138 = arith.constant 1.280000e+02 : f32
    %438 = vector.broadcast %cst_138 : f32 to vector<8x1xf32>
    %439 = arith.divf %437, %438 : vector<8x1xf32>
    %440 = arith.mulf %435, %435 : vector<8x128xf32>
    %cst_139 = arith.constant dense<0.000000e+00> : vector<8xf32>
    %441 = vector.multi_reduction <add>, %440, %cst_139 [1] : vector<8x128xf32> to vector<8xf32>
    %442 = vector.shape_cast %441 : vector<8xf32> to vector<8x1xf32>
    %cst_140 = arith.constant 1.280000e+02 : f32
    %443 = vector.broadcast %cst_140 : f32 to vector<8x1xf32>
    %444 = arith.divf %442, %443 : vector<8x1xf32>
    %445 = arith.mulf %439, %439 : vector<8x1xf32>
    %446 = arith.subf %444, %445 : vector<8x1xf32>
    %447 = vector.broadcast %439 : vector<8x1xf32> to vector<8x128xf32>
    %448 = arith.subf %435, %447 : vector<8x128xf32>
    %cst_141 = arith.constant 9.99999974E-6 : f32
    %449 = vector.broadcast %cst_141 : f32 to vector<8x1xf32>
    %450 = arith.addf %446, %449 : vector<8x1xf32>
    %451 = math.rsqrt %450 : vector<8x1xf32>
    %452 = vector.broadcast %451 : vector<8x1xf32> to vector<8x128xf32>
    %453 = arith.mulf %448, %452 : vector<8x128xf32>
    %454 = vector.broadcast %14 : vector<1x128xf32> to vector<8x128xf32>
    %455 = arith.mulf %453, %454 : vector<8x128xf32>
    %456 = vector.broadcast %15 : vector<1x128xf32> to vector<8x128xf32>
    %457 = arith.addf %455, %456 : vector<8x128xf32>
    %458 = arith.index_cast %c5_i32 : i32 to index
    %c0_142 = arith.constant 0 : index
    %c0_143 = arith.constant 0 : index
    %459 = vector.load %arg8[%458, %c0_142, %c0_143] : memref<6x8x128xf32, #tpu.memory_space<vmem>>, vector<1x8x128xf32>
    %460 = vector.shape_cast %459 : vector<1x8x128xf32> to vector<8x128xf32>
    %461 = vector.shape_cast %457 : vector<8x128xf32> to vector<1x8x128xf32>
    tpu.vector_store %arg8[%458, %c0_142, %c0_143], %461 {strides = array<i32>} : memref<6x8x128xf32, #tpu.memory_space<vmem>>, vector<1x8x128xf32>,
    %c6_i32_144 = arith.constant 6 : i32
    %c0_145 = arith.constant 0 : index
    %c0_146 = arith.constant 0 : index
    %462 = vector.load %arg9[%c0_145, %c0_146] : memref<8x128xf32, #tpu.memory_space<vmem>>, vector<8x128xf32>
    tpu.vector_store %arg9[%c0_145, %c0_146], %434 {strides = array<i32>} : memref<8x128xf32, #tpu.memory_space<vmem>>, vector<8x128xf32>,
    return
  }
  func.func @transform_0(%arg0: i32) -> (i32, i32, i32) {
    %c0_i32 = arith.constant 0 : i32
    %c0_i32_0 = arith.constant 0 : i32
    %c0_i32_1 = arith.constant 0 : i32
    return %arg0, %c0_i32, %c0_i32_0 : i32, i32, i32
  }
  func.func @transform_1(%arg0: i32) -> (i32, i32) {
    %c0_i32 = arith.constant 0 : i32
    %c0_i32_0 = arith.constant 0 : i32
    %c0_i32_1 = arith.constant 0 : i32
    return %c0_i32, %c0_i32_0 : i32, i32
  }
  func.func @transform_2(%arg0: i32) -> (i32, i32) {
    %c0_i32 = arith.constant 0 : i32
    %c0_i32_0 = arith.constant 0 : i32
    %c0_i32_1 = arith.constant 0 : i32
    return %c0_i32, %c0_i32_0 : i32, i32
  }
  func.func @transform_3(%arg0: i32) -> (i32, i32) {
    %c0_i32 = arith.constant 0 : i32
    %c0_i32_0 = arith.constant 0 : i32
    %c0_i32_1 = arith.constant 0 : i32
    return %c0_i32, %c0_i32_0 : i32, i32
  }
  func.func @transform_4(%arg0: i32) -> (i32, i32) {
    %c0_i32 = arith.constant 0 : i32
    %c0_i32_0 = arith.constant 0 : i32
    %c0_i32_1 = arith.constant 0 : i32
    return %c0_i32, %c0_i32_0 : i32, i32
  }
  func.func @transform_5(%arg0: i32) -> (i32, i32) {
    %c0_i32 = arith.constant 0 : i32
    %c0_i32_0 = arith.constant 0 : i32
    %c0_i32_1 = arith.constant 0 : i32
    return %c0_i32, %c0_i32_0 : i32, i32
  }
  func.func @transform_6(%arg0: i32) -> (i32, i32) {
    %c0_i32 = arith.constant 0 : i32
    %c0_i32_0 = arith.constant 0 : i32
    %c0_i32_1 = arith.constant 0 : i32
    return %c0_i32, %c0_i32_0 : i32, i32
  }
  func.func @transform_7(%arg0: i32) -> (i32, i32, i32) {
    %c0_i32 = arith.constant 0 : i32
    %c0_i32_0 = arith.constant 0 : i32
    %c0_i32_1 = arith.constant 0 : i32
    return %arg0, %c0_i32, %c0_i32_0 : i32, i32, i32
  }
  func.func @transform_8(%arg0: i32) -> (i32, i32) {
    %c0_i32 = arith.constant 0 : i32
    %c0_i32_0 = arith.constant 0 : i32
    %c0_i32_1 = arith.constant 0 : i32
    return %c0_i32, %c0_i32_0 : i32, i32
  }
}

</mosaic_0001>

<llo_original>
// kernel: lnn_block_forward.1
$region0: #{lnn_block_forward.1}
  #allocation0 [shape = 'u32[]', space=smem, size = 0x4, offset = 0x4, fixed_abs, tag = 'smem constant byte address 0x4 - core index']
  #allocation1 [shape = 'u32[144,128]{1,0:T(1,128)}', space=vmem, size = 0x12000, scoped, tag = 'internal scratch']
  #allocation2 [shape = 'f32[6,8,256]{2,1,0:T(8,128)}', space=vmem, size = 0xc000, scoped, tag = 'scratch operand']
  %s0 = inlined_call_operand.vmem [shape: f32[18,8,128], index: 0, kind: input, shape index: {}]
  %s1 = inlined_call_operand.vmem [shape: f32[8,128], index: 1, kind: input, shape index: {}]
  %s2 = inlined_call_operand.vmem [shape: bf16[128,256], index: 2, kind: input, shape index: {}]
  %s3 = inlined_call_operand.vmem [shape: bf16[128,256], index: 3, kind: input, shape index: {}]
  %s4 = inlined_call_operand.vmem [shape: f32[1,256], index: 4, kind: input, shape index: {}]
  %s5 = inlined_call_operand.vmem [shape: f32[1,128], index: 5, kind: input, shape index: {}]
  %s6 = inlined_call_operand.vmem [shape: f32[1,128], index: 6, kind: input, shape index: {}]
  %s7 = inlined_call_operand.vmem [shape: f32[18,8,128], index: 7, kind: output, shape index: {0}]
  %s8 = inlined_call_operand.vmem [shape: f32[8,128], index: 8, kind: output, shape index: {1}]
  %9 = xla_tuple %s7, %s8
  %s10 = sld [smem:[#allocation0]]
  $region73: #{lnn_block_forward.1} parent=0
    _
  %s12 = ssub.s32 1, %s10
  %s13 = scalar_select 0, %s12, %s10
  loop: start=0, step=1, limit=5
  $region2: #{lnn_block_forward.1} parent=0 // loop_pre_header
    _
  $region3: #{lnn_block_forward.1} parent=0 // loop_header
    %s15 = sphi 0, %s19
    %p16 = scmp.ge.s32.totalorder %s15, 5
    %s25 = sphi 0, %s27
    %s28 = sphi 0, %s25
    %s29 = sphi 0, %s28
    %s45 = sphi 0, %s29
    %s49 = sphi 0, %s49
    %s51 = sphi 0, %s49
    %s52 = sphi 0, %s51
    %s66 = sphi 0, %s52
    %s70 = sphi 0, %s70
    %s72 = sphi 0, %s70
    %s73 = sphi 0, %s72
    %s87 = sphi 0, %s73
    %s91 = sphi 0, %s91
    %s93 = sphi 0, %s91
    %s94 = sphi 0, %s93
    %s108 = sphi 0, %s94
    %s112 = sphi 0, %s112
    %s114 = sphi 0, %s112
    %s115 = sphi 0, %s114
    %s129 = sphi 0, %s115
    %s133 = sphi 0, %s133
    %s135 = sphi 0, %s133
    %s136 = sphi 0, %s135
    %s150 = sphi 0, %s136
    %s154 = sphi 0, %s154
    %s156 = sphi 0, %s154
    %s157 = sphi 0, %s156
    %s171 = sphi 0, %s157
    %s177 = sphi 0, %s179
    %s180 = sphi 0, %s177
    %s181 = sphi 0, %s180
    %s197 = sphi 0, %s181
    %s201 = sphi 0, %s201
    %s203 = sphi 0, %s201
    %s204 = sphi 0, %s203
    %s218 = sphi 0, %s204
  $region4: #{lnn_block_forward.1} parent=0 // loop_header_branch
    %18 = sbr.rel (%p16) target = $region8
  $region5: #{lnn_block_forward.1} parent=0 // loop_body
    %s20 = ssub.s32 %s15, 1
    %s21 = ssub.s32 %s15, 2
    %s22 = sadd.s32 %s15, 1
    %s23 = ssub.s32 %s15, %s22
    %p24 = scmp.eq.s32.totalorder %s23, 0
    %s26 = sadd.s32 %s25, 1
    %s27 = scalar_select %p24, %s25, %s26
    %p30 = pneg %p24
    %p31 = scmp.eq.s32.totalorder %s15, 2
    %p32 = por %p30, %p31
    %p33 = scmp.ne.s32.totalorder %s25, %s28
    %p34 = scmp.eq.s32.totalorder %s15, 0
    %p35 = por %p33, %p34
    %p36 = scmp.ne.s32.totalorder %s25, %s28
    %p37 = scmp.eq.s32.totalorder %s20, 2
    %p38 = por %p36, %p37
    %p39 = scmp.ne.s32.totalorder %s28, %s29
    %p40 = scmp.eq.s32.totalorder %s20, 0
    %p41 = por %p39, %p40
    %p42 = scmp.ne.s32.totalorder %s28, %s29
    %p43 = scmp.eq.s32.totalorder %s21, 2
    %p44 = por %p42, %p43
    %p46 = scmp.ne.s32.totalorder %s29, %s45
    %p47 = scmp.eq.s32.totalorder %s21, 0
    %p48 = por %p46, %p47
    %s50 = sadd.s32 %s49, 1
    %p53 = scmp.eq.s32.totalorder %s15, 2
    %p54 = scmp.ne.s32.totalorder %s49, %s51
    %p55 = scmp.eq.s32.totalorder %s15, 0
    %p56 = por %p54, %p55
    %p57 = scmp.ne.s32.totalorder %s49, %s51
    %p58 = scmp.eq.s32.totalorder %s20, 2
    %p59 = por %p57, %p58
    %p60 = scmp.ne.s32.totalorder %s51, %s52
    %p61 = scmp.eq.s32.totalorder %s20, 0
    %p62 = por %p60, %p61
    %p63 = scmp.ne.s32.totalorder %s51, %s52
    %p64 = scmp.eq.s32.totalorder %s21, 2
    %p65 = por %p63, %p64
    %p67 = scmp.ne.s32.totalorder %s52, %s66
    %p68 = scmp.eq.s32.totalorder %s21, 0
    %p69 = por %p67, %p68
    %s71 = sadd.s32 %s70, 1
    %p74 = scmp.eq.s32.totalorder %s15, 2
    %p75 = scmp.ne.s32.totalorder %s70, %s72
    %p76 = scmp.eq.s32.totalorder %s15, 0
    %p77 = por %p75, %p76
    %p78 = scmp.ne.s32.totalorder %s70, %s72
    %p79 = scmp.eq.s32.totalorder %s20, 2
    %p80 = por %p78, %p79
    %p81 = scmp.ne.s32.totalorder %s72, %s73
    %p82 = scmp.eq.s32.totalorder %s20, 0
    %p83 = por %p81, %p82
    %p84 = scmp.ne.s32.totalorder %s72, %s73
    %p85 = scmp.eq.s32.totalorder %s21, 2
    %p86 = por %p84, %p85
    %p88 = scmp.ne.s32.totalorder %s73, %s87
    %p89 = scmp.eq.s32.totalorder %s21, 0
    %p90 = por %p88, %p89
    %s92 = sadd.s32 %s91, 1
    %p95 = scmp.eq.s32.totalorder %s15, 2
    %p96 = scmp.ne.s32.totalorder %s91, %s93
    %p97 = scmp.eq.s32.totalorder %s15, 0
    %p98 = por %p96, %p97
    %p99 = scmp.ne.s32.totalorder %s91, %s93
    %p100 = scmp.eq.s32.totalorder %s20, 2
    %p101 = por %p99, %p100
    %p102 = scmp.ne.s32.totalorder %s93, %s94
    %p103 = scmp.eq.s32.totalorder %s20, 0
    %p104 = por %p102, %p103
    %p105 = scmp.ne.s32.totalorder %s93, %s94
    %p106 = scmp.eq.s32.totalorder %s21, 2
    %p107 = por %p105, %p106
    %p109 = scmp.ne.s32.totalorder %s94, %s108
    %p110 = scmp.eq.s32.totalorder %s21, 0
    %p111 = por %p109, %p110
    %s113 = sadd.s32 %s112, 1
    %p116 = scmp.eq.s32.totalorder %s15, 2
    %p117 = scmp.ne.s32.totalorder %s112, %s114
    %p118 = scmp.eq.s32.totalorder %s15, 0
    %p119 = por %p117, %p118
    %p120 = scmp.ne.s32.totalorder %s112, %s114
    %p121 = scmp.eq.s32.totalorder %s20, 2
    %p122 = por %p120, %p121
    %p123 = scmp.ne.s32.totalorder %s114, %s115
    %p124 = scmp.eq.s32.totalorder %s20, 0
    %p125 = por %p123, %p124
    %p126 = scmp.ne.s32.totalorder %s114, %s115
    %p127 = scmp.eq.s32.totalorder %s21, 2
    %p128 = por %p126, %p127
    %p130 = scmp.ne.s32.totalorder %s115, %s129
    %p131 = scmp.eq.s32.totalorder %s21, 0
    %p132 = por %p130, %p131
    %s134 = sadd.s32 %s133, 1
    %p137 = scmp.eq.s32.totalorder %s15, 2
    %p138 = scmp.ne.s32.totalorder %s133, %s135
    %p139 = scmp.eq.s32.totalorder %s15, 0
    %p140 = por %p138, %p139
    %p141 = scmp.ne.s32.totalorder %s133, %s135
    %p142 = scmp.eq.s32.totalorder %s20, 2
    %p143 = por %p141, %p142
    %p144 = scmp.ne.s32.totalorder %s135, %s136
    %p145 = scmp.eq.s32.totalorder %s20, 0
    %p146 = por %p144, %p145
    %p147 = scmp.ne.s32.totalorder %s135, %s136
    %p148 = scmp.eq.s32.totalorder %s21, 2
    %p149 = por %p147, %p148
    %p151 = scmp.ne.s32.totalorder %s136, %s150
    %p152 = scmp.eq.s32.totalorder %s21, 0
    %p153 = por %p151, %p152
    %s155 = sadd.s32 %s154, 1
    %p158 = scmp.eq.s32.totalorder %s15, 2
    %p159 = scmp.ne.s32.totalorder %s154, %s156
    %p160 = scmp.eq.s32.totalorder %s15, 0
    %p161 = por %p159, %p160
    %p162 = scmp.ne.s32.totalorder %s154, %s156
    %p163 = scmp.eq.s32.totalorder %s20, 2
    %p164 = por %p162, %p163
    %p165 = scmp.ne.s32.totalorder %s156, %s157
    %p166 = scmp.eq.s32.totalorder %s20, 0
    %p167 = por %p165, %p166
    %p168 = scmp.ne.s32.totalorder %s156, %s157
    %p169 = scmp.eq.s32.totalorder %s21, 2
    %p170 = por %p168, %p169
    %p172 = scmp.ne.s32.totalorder %s157, %s171
    %p173 = scmp.eq.s32.totalorder %s21, 0
    %p174 = por %p172, %p173
    %s175 = ssub.s32 %s15, %s22
    %p176 = scmp.eq.s32.totalorder %s175, 0
    %s178 = sadd.s32 %s177, 1
    %s179 = scalar_select %p176, %s177, %s178
    %p182 = pneg %p176
    %p183 = scmp.eq.s32.totalorder %s15, 2
    %p184 = por %p182, %p183
    %p185 = scmp.ne.s32.totalorder %s177, %s180
    %p186 = scmp.eq.s32.totalorder %s15, 0
    %p187 = por %p185, %p186
    %p188 = scmp.ne.s32.totalorder %s177, %s180
    %p189 = scmp.eq.s32.totalorder %s20, 2
    %p190 = por %p188, %p189
    %p191 = scmp.ne.s32.totalorder %s180, %s181
    %p192 = scmp.eq.s32.totalorder %s20, 0
    %p193 = por %p191, %p192
    %p194 = scmp.ne.s32.totalorder %s180, %s181
    %p195 = scmp.eq.s32.totalorder %s21, 2
    %p196 = por %p194, %p195
    %p198 = scmp.ne.s32.totalorder %s181, %s197
    %p199 = scmp.eq.s32.totalorder %s21, 0
    %p200 = por %p198, %p199
    %s202 = sadd.s32 %s201, 1
    %p205 = scmp.eq.s32.totalorder %s15, 2
    %p206 = scmp.ne.s32.totalorder %s201, %s203
    %p207 = scmp.eq.s32.totalorder %s15, 0
    %p208 = por %p206, %p207
    %p209 = scmp.ne.s32.totalorder %s201, %s203
    %p210 = scmp.eq.s32.totalorder %s20, 2
    %p211 = por %p209, %p210
    %p212 = scmp.ne.s32.totalorder %s203, %s204
    %p213 = scmp.eq.s32.totalorder %s20, 0
    %p214 = por %p212, %p213
    %p215 = scmp.ne.s32.totalorder %s203, %s204
    %p216 = scmp.eq.s32.totalorder %s21, 2
    %p217 = por %p215, %p216
    %p219 = scmp.ne.s32.totalorder %s204, %s218
    %p220 = scmp.eq.s32.totalorder %s21, 0
    %p221 = por %p219, %p220
    %p222 = scmp.le.s32.totalorder 1, %s15
    %p223 = scmp.lt.s32.totalorder %s15, 4
    %p224 = pnand %p222, %p223
    %p225 = pneg %p224
    // Predicated region
    $region9: #{lnn_block_forward.1} parent=5 // pred_check
      _
    $region10: #{lnn_block_forward.1} parent=5 // pred_check_branch
      %227 = sbr.rel (%p224) target = $region12
    $region11: #{lnn_block_forward.1} parent=5 // pred_region
      %s228 = ssub.s32 %s15, 1
      // Predicated region
      $region13: #{lnn_block_forward.1} parent=11 // pred_check
        %p229 = pneg %p62
      $region14: #{lnn_block_forward.1} parent=11 // pred_check_branch
        %231 = sbr.rel (%p229) target = $region16
      $region15: #{lnn_block_forward.1} parent=11 // pred_region
        _
      $region16: #{lnn_block_forward.1} parent=11 // pred_fallthru
        _
      // Predicated region
      $region17: #{lnn_block_forward.1} parent=11 // pred_check
        %p232 = pneg %p83
      $region18: #{lnn_block_forward.1} parent=11 // pred_check_branch
        %234 = sbr.rel (%p232) target = $region20
      $region19: #{lnn_block_forward.1} parent=11 // pred_region
        _
      $region20: #{lnn_block_forward.1} parent=11 // pred_fallthru
        _
      // Predicated region
      $region21: #{lnn_block_forward.1} parent=11 // pred_check
        %p235 = pneg %p104
      $region22: #{lnn_block_forward.1} parent=11 // pred_check_branch
        %237 = sbr.rel (%p235) target = $region24
      $region23: #{lnn_block_forward.1} parent=11 // pred_region
        _
      $region24: #{lnn_block_forward.1} parent=11 // pred_fallthru
        _
      // Predicated region
      $region25: #{lnn_block_forward.1} parent=11 // pred_check
        %p238 = pneg %p125
      $region26: #{lnn_block_forward.1} parent=11 // pred_check_branch
        %240 = sbr.rel (%p238) target = $region28
      $region27: #{lnn_block_forward.1} parent=11 // pred_region
        _
      $region28: #{lnn_block_forward.1} parent=11 // pred_fallthru
        _
      // Predicated region
      $region29: #{lnn_block_forward.1} parent=11 // pred_check
        %p241 = pneg %p146
      $region30: #{lnn_block_forward.1} parent=11 // pred_check_branch
        %243 = sbr.rel (%p241) target = $region32
      $region31: #{lnn_block_forward.1} parent=11 // pred_region
        _
      $region32: #{lnn_block_forward.1} parent=11 // pred_fallthru
        _
      // Predicated region
      $region33: #{lnn_block_forward.1} parent=11 // pred_check
        %p244 = pneg %p167
      $region34: #{lnn_block_forward.1} parent=11 // pred_check_branch
        %246 = sbr.rel (%p244) target = $region36
      $region35: #{lnn_block_forward.1} parent=11 // pred_region
        _
      $region36: #{lnn_block_forward.1} parent=11 // pred_fallthru
        _
    $region12: #{lnn_block_forward.1} parent=5 // pred_fallthru
      _
    %p247 = scmp.lt.s32.totalorder %s15, 3
    // Predicated region
    $region37: #{lnn_block_forward.1} parent=5 // pred_check
      %p248 = pneg %p247
    $region38: #{lnn_block_forward.1} parent=5 // pred_check_branch
      %250 = sbr.rel (%p248) target = $region40
    $region39: #{lnn_block_forward.1} parent=5 // pred_region
      // Predicated region
      $region41: #{lnn_block_forward.1} parent=39 // pred_check
        %p251 = pneg %p35
      $region42: #{lnn_block_forward.1} parent=39 // pred_check_branch
        %253 = sbr.rel (%p251) target = $region44
      $region43: #{lnn_block_forward.1} parent=39 // pred_region
        %s254 = smul.u32 6, %s15
        %p255 = scmp.lt.s32.totalorder %s254, 17
        %s256 = scalar_select %p255, %s254, 17
        %s257 = smul.addr %s256, 8
        %s258 = scalar_lea.vmem %s0, %s257
        %s259 = smul.u32 6, %s15
      $region44: #{lnn_block_forward.1} parent=39 // pred_fallthru
        _
    $region40: #{lnn_block_forward.1} parent=5 // pred_fallthru
      _
    %p260 = scmp.le.s32.totalorder 1, %s15
    %p261 = scmp.lt.s32.totalorder %s15, 4
    %p262 = pnand %p260, %p261
    %p263 = pneg %p262
    // Predicated region
    $region45: #{lnn_block_forward.1} parent=5 // pred_check
      _
    $region46: #{lnn_block_forward.1} parent=5 // pred_check_branch
      %265 = sbr.rel (%p262) target = $region48
    $region47: #{lnn_block_forward.1} parent=5 // pred_region
      %s266 = ssub.s32 %s15, 1
      %s267 = smul.u32 6, %s20
      %p268 = scmp.lt.s32.totalorder %s267, 17
      %s269 = scalar_select %p268, %s267, 17
      %s270 = smul.addr %s269, 8
      %s271 = scalar_lea.vmem %s0, %s270
      %p272 = pneg %p41
      %p273 = pneg %p38
      %p274 = pneg %p62
      %p275 = pneg %p59
      %p276 = pneg %p83
      %p277 = pneg %p80
      %p278 = pneg %p104
      %p279 = pneg %p101
      %p280 = pneg %p125
      %p281 = pneg %p122
      %p282 = pneg %p146
      %p283 = pneg %p143
      %p284 = pneg %p167
      %p285 = pneg %p164
      %p286 = pneg %p193
      %p287 = pneg %p190
      %s288 = smul.u32 6, %s20
      %p289 = scmp.lt.s32.totalorder %s288, 17
      %s290 = scalar_select %p289, %s288, 17
      %s291 = smul.addr %s290, 8
      %s292 = scalar_lea.vmem %s7, %s291
      %p293 = pneg %p214
      %p294 = pneg %p211
      %s295 = smul.u32 6, %s20
      %p296 = scmp.lt.s32.totalorder %s295, 17
      %s297 = scalar_select %p296, %s295, 17
      %s298 = smul.addr %s297, 8
      %s299 = scalar_lea.vmem %s0, %s298
      %s300 = smul.u32 6, %s20
      %s301 = smul.u32 6, %s20
      %p302 = scmp.lt.s32.totalorder %s301, 17
      %s303 = scalar_select %p302, %s301, 17
      %s304 = smul.addr %s303, 8
      %s305 = scalar_lea.vmem %s7, %s304
      %s306 = smul.u32 6, %s20
      %p308 = scmp.eq.s32.totalorder %s20, 0
      // Predicated region
      $region49: #{lnn_block_forward.1} parent=47 // pred_check
        %p309 = pneg %p308
      $region50: #{lnn_block_forward.1} parent=47 // pred_check_branch
        %311 = sbr.rel (%p309) target = $region52
      $region51: #{lnn_block_forward.1} parent=47 // pred_region
        %v312 = vld [vmem:[%s1] sm:$0xff]
        %313 = vst [vmem:[%s8] sm:$0xff] %v312
      $region52: #{lnn_block_forward.1} parent=47 // pred_fallthru
        _
      %v314 = vld [vmem:[%s299] sm:$0xff]
      %v315 = vld [vmem:[%s299 + $0x8] sm:$0xff]
      %v316 = vld [vmem:[%s299 + $0x10] sm:$0xff]
      %v317 = vld [vmem:[%s299 + $0x18] sm:$0xff]
      %v318 = vld [vmem:[%s299 + $0x20] sm:$0xff]
      %v319 = vld [vmem:[%s299 + $0x28] sm:$0xff]
      %v320 = vpack.c.bf16 %v315, %v314
      %v321 = vpack.c.bf16 %v317, %v316
      %v322 = vpack.c.bf16 %v319, %v318
      %v323 = vld [vmem:[%s3] sm:$0xff]
      %v324 = vld [vmem:[%s3 + $0x8] sm:$0xff]
      %v325 = vld [vmem:[%s3 + $0x10] sm:$0xff]
      %v326 = vld [vmem:[%s3 + $0x18] sm:$0xff]
      %v327 = vld [vmem:[%s3 + $0x20] sm:$0xff]
      %v328 = vld [vmem:[%s3 + $0x28] sm:$0xff]
      %v329 = vld [vmem:[%s3 + $0x30] sm:$0xff]
      %v330 = vld [vmem:[%s3 + $0x38] sm:$0xff]
      %v331 = vld [vmem:[%s3 + $0x40] sm:$0xff]
      %v332 = vld [vmem:[%s3 + $0x48] sm:$0xff]
      %v333 = vld [vmem:[%s3 + $0x50] sm:$0xff]
      %v334 = vld [vmem:[%s3 + $0x58] sm:$0xff]
      %v335 = vld [vmem:[%s3 + $0x60] sm:$0xff]
      %v336 = vld [vmem:[%s3 + $0x68] sm:$0xff]
      %v337 = vld [vmem:[%s3 + $0x70] sm:$0xff]
      %v338 = vld [vmem:[%s3 + $0x78] sm:$0xff]
      %v339 = vld [vmem:[%s4] sm:$0x3]
      %v341 = vlaneseq
      %v342 = vshrl.u32 %v341, 7
      %v343 = vsub.s32 0, %v342
      %v344 = vrot.slane %v339, %v343
      %v345 = vlaneseq
      %v346 = vshrl.u32 %v345, 7
      %v347 = vsub.s32 1, %v346
      %v348 = vrot.slane %v339, %v347
      %v367 = vunpack.c.l.b16 %v323
      %v368 = vunpack.c.h.b16 %v323
      %v369 = vunpack.c.l.b16 %v324
      %v370 = vunpack.c.h.b16 %v324
      %v371 = vunpack.c.l.b16 %v325
      %v372 = vunpack.c.h.b16 %v325
      %v373 = vunpack.c.l.b16 %v326
      %v374 = vunpack.c.h.b16 %v326
      %v375 = vunpack.c.l.b16 %v327
      %v376 = vunpack.c.h.b16 %v327
      %v377 = vunpack.c.l.b16 %v328
      %v378 = vunpack.c.h.b16 %v328
      %v379 = vunpack.c.l.b16 %v329
      %v380 = vunpack.c.h.b16 %v329
      %v381 = vunpack.c.l.b16 %v330
      %v382 = vunpack.c.h.b16 %v330
      %v383 = vunpack.c.l.b16 %v331
      %v384 = vunpack.c.h.b16 %v331
      %v385 = vunpack.c.l.b16 %v332
      %v386 = vunpack.c.h.b16 %v332
      %v387 = vunpack.c.l.b16 %v333
      %v388 = vunpack.c.h.b16 %v333
      %v389 = vunpack.c.l.b16 %v334
      %v390 = vunpack.c.h.b16 %v334
      %v391 = vunpack.c.l.b16 %v335
      %v392 = vunpack.c.h.b16 %v335
      %v393 = vunpack.c.l.b16 %v336
      %v394 = vunpack.c.h.b16 %v336
      %v395 = vunpack.c.l.b16 %v337
      %v396 = vunpack.c.h.b16 %v337
      %v397 = vunpack.c.l.b16 %v338
      %v398 = vunpack.c.h.b16 %v338
      %v399 = vpack.c.b16 %v369, %v367
      %v400 = vpack.c.b16 %v370, %v368
      %v401 = vpack.c.b16 %v373, %v371
      %v402 = vpack.c.b16 %v374, %v372
      %v403 = vpack.c.b16 %v377, %v375
      %v404 = vpack.c.b16 %v378, %v376
      %v405 = vpack.c.b16 %v381, %v379
      %v406 = vpack.c.b16 %v382, %v380
      %v407 = vpack.c.b16 %v385, %v383
      %v408 = vpack.c.b16 %v386, %v384
      %v409 = vpack.c.b16 %v389, %v387
      %v410 = vpack.c.b16 %v390, %v388
      %v411 = vpack.c.b16 %v393, %v391
      %v412 = vpack.c.b16 %v394, %v392
      %v413 = vpack.c.b16 %v397, %v395
      %v414 = vpack.c.b16 %v398, %v396
      %431 = vmatprep.subr.bf16.mxu0 %v400
      %432 = vmatpush1.bf16.msra.mxu0 %v399
      %433 = vmatprep.subr.bf16.mxu0 %v402
      %434 = vmatpush1.bf16.msra.mxu0 %v401
      %435 = vmatprep.subr.bf16.mxu0 %v404
      %436 = vmatpush1.bf16.msra.mxu0 %v403
      %437 = vmatprep.subr.bf16.mxu0 %v406
      %438 = vmatpush1.bf16.msra.mxu0 %v405
      %439 = vmatprep.subr.bf16.mxu0 %v408
      %440 = vmatpush1.bf16.msra.mxu0 %v407
      %441 = vmatprep.subr.bf16.mxu0 %v410
      %442 = vmatpush1.bf16.msra.mxu0 %v409
      %443 = vmatprep.subr.bf16.mxu0 %v412
      %444 = vmatpush1.bf16.msra.mxu0 %v411
      %445 = vmatprep.subr.bf16.mxu0 %v414
      %446 = vmatpush1.bf16.msra.mxu0 %v413
      %447 = vmatprep.subr.bf16.mxu0 0
      %448 = vmatpush1.bf16.msra.mxu0 0
      %449 = vmatprep.subr.bf16.mxu0 0
      %450 = vmatpush1.bf16.msra.mxu0 0
      %451 = vmatprep.subr.bf16.mxu0 0
      %452 = vmatpush1.bf16.msra.mxu0 0
      %453 = vmatprep.subr.bf16.mxu0 0
      %454 = vmatpush1.bf16.msra.mxu0 0
      %455 = vmatprep.subr.bf16.mxu0 0
      %456 = vmatpush1.bf16.msra.mxu0 0
      %457 = vmatprep.subr.bf16.mxu0 0
      %458 = vmatpush1.bf16.msra.mxu0 0
      %459 = vmatprep.subr.bf16.mxu0 0
      %460 = vmatpush1.bf16.msra.mxu0 0
      %461 = vmatprep.subr.bf16.mxu0 0
      %462 = vmatpush1.bf16.msra.mxu0 0
      %463 = vmatprep.mubr.bf16.mxu0 0
      %464 = vmatmul.mubr.bf16.gmra.mrb[0].mxu0 %v320
      %v465 = vpop.f32.mrb[0].mxu0
      %v466 = vadd.f32 %v344, %v465
      %v467 = vpop.f32.mrb[0].mxu0
      %v468 = vadd.f32 %v348, %v467
      %v469 = vpop.f32.mrb[0].mxu0
      %v470 = vadd.f32 %v344, %v469
      %v471 = vpop.f32.mrb[0].mxu0
      %v472 = vadd.f32 %v348, %v471
      %473 = vmatprep.mubr.bf16.mxu0 0
      %474 = vmatmul.mubr.bf16.gmra.mrb[0].mxu0 %v321
      %v475 = vpop.f32.mrb[0].mxu0
      %v476 = vadd.f32 %v344, %v475
      %v477 = vpop.f32.mrb[0].mxu0
      %v478 = vadd.f32 %v348, %v477
      %v479 = vpop.f32.mrb[0].mxu0
      %v480 = vadd.f32 %v344, %v479
      %v481 = vpop.f32.mrb[0].mxu0
      %v482 = vadd.f32 %v348, %v481
      %483 = vmatprep.mubr.bf16.mxu0 0
      %484 = vmatmul.mubr.bf16.gmra.mrb[0].mxu0 %v322
      %v485 = vpop.f32.mrb[0].mxu0
      %v486 = vadd.f32 %v344, %v485
      %v487 = vpop.f32.mrb[0].mxu0
      %v488 = vadd.f32 %v348, %v487
      %v489 = vpop.f32.mrb[0].mxu0
      %v490 = vadd.f32 %v344, %v489
      %v491 = vpop.f32.mrb[0].mxu0
      %v492 = vadd.f32 %v348, %v491
      %493 = vdwg.mxu0
      %494 = vst [vmem:[#allocation2] sm:$0xff] %v466
      %495 = vst [vmem:[#allocation2 + $0x8] sm:$0xff] %v468
      %496 = vst [vmem:[#allocation2 + $0x10] sm:$0xff] %v470
      %497 = vst [vmem:[#allocation2 + $0x18] sm:$0xff] %v472
      %498 = vst [vmem:[#allocation2 + $0x20] sm:$0xff] %v476
      %499 = vst [vmem:[#allocation2 + $0x28] sm:$0xff] %v478
      %500 = vst [vmem:[#allocation2 + $0x30] sm:$0xff] %v480
      %501 = vst [vmem:[#allocation2 + $0x38] sm:$0xff] %v482
      %502 = vst [vmem:[#allocation2 + $0x40] sm:$0xff] %v486
      %503 = vst [vmem:[#allocation2 + $0x48] sm:$0xff] %v488
      %504 = vst [vmem:[#allocation2 + $0x50] sm:$0xff] %v490
      %505 = vst [vmem:[#allocation2 + $0x58] sm:$0xff] %v492
      %v506 = vld [vmem:[%s2] sm:$0xff]
      %v507 = vld [vmem:[%s2 + $0x8] sm:$0xff]
      %v508 = vld [vmem:[%s2 + $0x10] sm:$0xff]
      %v509 = vld [vmem:[%s2 + $0x18] sm:$0xff]
      %v510 = vld [vmem:[%s2 + $0x20] sm:$0xff]
      %v511 = vld [vmem:[%s2 + $0x28] sm:$0xff]
      %v512 = vld [vmem:[%s2 + $0x30] sm:$0xff]
      %v513 = vld [vmem:[%s2 + $0x38] sm:$0xff]
      %v514 = vld [vmem:[%s2 + $0x40] sm:$0xff]
      %v515 = vld [vmem:[%s2 + $0x48] sm:$0xff]
      %v516 = vld [vmem:[%s2 + $0x50] sm:$0xff]
      %v517 = vld [vmem:[%s2 + $0x58] sm:$0xff]
      %v518 = vld [vmem:[%s2 + $0x60] sm:$0xff]
      %v519 = vld [vmem:[%s2 + $0x68] sm:$0xff]
      %v520 = vld [vmem:[%s2 + $0x70] sm:$0xff]
      %v521 = vld [vmem:[%s2 + $0x78] sm:$0xff]
      %v522 = vld [vmem:[%s5] sm:$0x1]
      %v523 = vld [vmem:[%s6] sm:$0x1]
      %s524 = smul.u32 %s20, 6
      %v525 = vld [vmem:[%s8] sm:$0xff]
      %v526 = vld [vmem:[%s299] sm:$0xff]
      %v527 = vld [vmem:[#allocation2] sm:$0xff]
      %v528 = vld [vmem:[#allocation2 + $0x8] sm:$0xff]
      %v529 = vpack.c.bf16 %v525, %v525
      %v546 = vunpack.c.l.b16 %v506
      %v547 = vunpack.c.h.b16 %v506
      %v548 = vunpack.c.l.b16 %v507
      %v549 = vunpack.c.h.b16 %v507
      %v550 = vunpack.c.l.b16 %v508
      %v551 = vunpack.c.h.b16 %v508
      %v552 = vunpack.c.l.b16 %v509
      %v553 = vunpack.c.h.b16 %v509
      %v554 = vunpack.c.l.b16 %v510
      %v555 = vunpack.c.h.b16 %v510
      %v556 = vunpack.c.l.b16 %v511
      %v557 = vunpack.c.h.b16 %v511
      %v558 = vunpack.c.l.b16 %v512
      %v559 = vunpack.c.h.b16 %v512
      %v560 = vunpack.c.l.b16 %v513
      %v561 = vunpack.c.h.b16 %v513
      %v562 = vunpack.c.l.b16 %v514
      %v563 = vunpack.c.h.b16 %v514
      %v564 = vunpack.c.l.b16 %v515
      %v565 = vunpack.c.h.b16 %v515
      %v566 = vunpack.c.l.b16 %v516
      %v567 = vunpack.c.h.b16 %v516
      %v568 = vunpack.c.l.b16 %v517
      %v569 = vunpack.c.h.b16 %v517
      %v570 = vunpack.c.l.b16 %v518
      %v571 = vunpack.c.h.b16 %v518
      %v572 = vunpack.c.l.b16 %v519
      %v573 = vunpack.c.h.b16 %v519
      %v574 = vunpack.c.l.b16 %v520
      %v575 = vunpack.c.h.b16 %v520
      %v576 = vunpack.c.l.b16 %v521
      %v577 = vunpack.c.h.b16 %v521
      %v578 = vpack.c.b16 %v548, %v546
      %v579 = vpack.c.b16 %v549, %v547
      %v580 = vpack.c.b16 %v552, %v550
      %v581 = vpack.c.b16 %v553, %v551
      %v582 = vpack.c.b16 %v556, %v554
      %v583 = vpack.c.b16 %v557, %v555
      %v584 = vpack.c.b16 %v560, %v558
      %v585 = vpack.c.b16 %v561, %v559
      %v586 = vpack.c.b16 %v564, %v562
      %v587 = vpack.c.b16 %v565, %v563
      %v588 = vpack.c.b16 %v568, %v566
      %v589 = vpack.c.b16 %v569, %v567
      %v590 = vpack.c.b16 %v572, %v570
      %v591 = vpack.c.b16 %v573, %v571
      %v592 = vpack.c.b16 %v576, %v574
      %v593 = vpack.c.b16 %v577, %v575
      %610 = vmatprep.subr.bf16.mxu0 %v579
      %611 = vmatpush1.bf16.msra.mxu0 %v578
      %612 = vmatprep.subr.bf16.mxu0 %v581
      %613 = vmatpush1.bf16.msra.mxu0 %v580
      %614 = vmatprep.subr.bf16.mxu0 %v583
      %615 = vmatpush1.bf16.msra.mxu0 %v582
      %616 = vmatprep.subr.bf16.mxu0 %v585
      %617 = vmatpush1.bf16.msra.mxu0 %v584
      %618 = vmatprep.subr.bf16.mxu0 %v587
      %619 = vmatpush1.bf16.msra.mxu0 %v586
      %620 = vmatprep.subr.bf16.mxu0 %v589
      %621 = vmatpush1.bf16.msra.mxu0 %v588
      %622 = vmatprep.subr.bf16.mxu0 %v591
      %623 = vmatpush1.bf16.msra.mxu0 %v590
      %624 = vmatprep.subr.bf16.mxu0 %v593
      %625 = vmatpush1.bf16.msra.mxu0 %v592
      %626 = vmatprep.subr.bf16.mxu0 0
      %627 = vmatpush1.bf16.msra.mxu0 0
      %628 = vmatprep.subr.bf16.mxu0 0
      %629 = vmatpush1.bf16.msra.mxu0 0
      %630 = vmatprep.subr.bf16.mxu0 0
      %631 = vmatpush1.bf16.msra.mxu0 0
      %632 = vmatprep.subr.bf16.mxu0 0
      %633 = vmatpush1.bf16.msra.mxu0 0
      %634 = vmatprep.subr.bf16.mxu0 0
      %635 = vmatpush1.bf16.msra.mxu0 0
      %636 = vmatprep.subr.bf16.mxu0 0
      %637 = vmatpush1.bf16.msra.mxu0 0
      %638 = vmatprep.subr.bf16.mxu0 0
      %639 = vmatpush1.bf16.msra.mxu0 0
      %640 = vmatprep.subr.bf16.mxu0 0
      %641 = vmatpush1.bf16.msra.mxu0 0
      %642 = vmatprep.mubr.bf16.mxu0 0
      %643 = vmatmul.mubr.bf16.gmra.mrb[0].mxu0 %v529
      %v644 = vpop.f32.mrb[0].mxu0
      %v645 = vadd.f32 %v527, %v644
      %v646 = vpop.f32.mrb[0].mxu0
      %v647 = vadd.f32 %v528, %v646
      %v648 = vpop.f32.mrb[0].mxu0
      %v649 = vpop.f32.mrb[0].mxu0
      %650 = vdwg.mxu0
      %v651 = vmax.f32 %v647, 0.0
      %vm652 = vcmp.ne.f32.partialorder %v647, %v647
      %v653 = vadd.f32 %v647, 0.0
      %v654 = vand.u32 2147483647, %v647
      %v655 = vsub.f32 0.0, %v654
      %v656 = vmul.f32 %v655, 1.442695
      %v657 = vpow.pop %v656
      %v658 = vadd.f32 %v657, 1.0
      %v659 = vlog2.pop %v658
      %v660 = vmul.f32 %v659, 0.6931472
      %v661 = vmul.f32 -0.5, %v657
      %v662 = vadd.f32 %v661, 1.0
      %v663 = vmul.f32 %v662, %v657
      %v664 = vand.u32 2147483647, %v657
      %vm665 = vcmp.lt.f32.partialorder %v664, 0.0004427343
      %v666 = vsel %vm665, %v663, %v660
      %v667 = vadd.f32 %v651, %v666
      %v668 = vsel %vm652, %v653, %v667
      %v669 = vadd.f32 %v668, 0.01
      %v670 = vrcp.pop %v669
      %v671 = vmul.f32 %v669, %v670
      %v672 = vsub.f32 2.0, %v671
      %v673 = vmul.f32 %v670, %v672
      %v674 = vsub.f32 0.0, %v525
      %v675 = vmul.f32 %v674, %v673
      %v676 = vtanh.pop %v645
      %v677 = vadd.f32 %v675, %v676
      %v678 = vmax.f32 %v677, -10.0
      %v679 = vmin.f32 %v678, 10.0
      %v680 = vmul.f32 %v679, 0.2
      %v681 = vadd.f32 %v525, %v680
      %p682 = scmp.lt.s32.totalorder %s524, 16
      %s683 = scalar_select %p682, 1, 0
      %v684 = vstv %s683
      %vm685 = vcmp.eq.s32.totalorder %v684, 1
      %v686 = vsel %vm685, %v681, %v525
      %v687 = vadd.f32 %v686, %v526
      %688 = vadd.xlane.f32.xlu0 %v687
      %v689 = vpop.xlane.xlu0 %688
      %v690 = vrcp.pop 128.0
      %v691 = vmul.f32 %v689, %v690
      %v692 = vmul.f32 %v687, %v687
      %693 = vadd.xlane.f32.xlu0 %v692
      %v694 = vpop.xlane.xlu0 %693
      %v695 = vmul.f32 %v694, %v690
      %v696 = vmul.f32 %v691, %v691
      %v697 = vsub.f32 %v695, %v696
      %v698 = vsub.f32 %v687, %v691
      %v699 = vadd.f32 %v697, 1e-05
      %v700 = vrsqrt.pop %v699
      %v701 = vmul.f32 %v698, %v700
      %v703 = vlaneseq
      %v704 = vshrl.u32 %v703, 7
      %v705 = vsub.s32 0, %v704
      %v706 = vrot.slane %v522, %v705
      %v708 = vmul.f32 %v701, %v706
      %v710 = vlaneseq
      %v711 = vshrl.u32 %v710, 7
      %v712 = vsub.s32 0, %v711
      %v713 = vrot.slane %v523, %v712
      %v715 = vadd.f32 %v708, %v713
      %716 = vst [vmem:[%s305] sm:$0xff] %v715
      %s717 = scalar_lea.vmem %s299, 8
      %v718 = vld [vmem:[%s717] sm:$0xff]
      %s719 = scalar_lea.vmem [#allocation2], 16
      %v720 = vld [vmem:[%s719] sm:$0xff]
      %v721 = vld [vmem:[%s719 + $0x8] sm:$0xff]
      %v722 = vpack.c.bf16 %v686, %v686
      %723 = vmatprep.subr.bf16.mxu0 %v579
      %724 = vmatpush1.bf16.msra.mxu0 %v578
      %725 = vmatprep.subr.bf16.mxu0 %v581
      %726 = vmatpush1.bf16.msra.mxu0 %v580
      %727 = vmatprep.subr.bf16.mxu0 %v583
      %728 = vmatpush1.bf16.msra.mxu0 %v582
      %729 = vmatprep.subr.bf16.mxu0 %v585
      %730 = vmatpush1.bf16.msra.mxu0 %v584
      %731 = vmatprep.subr.bf16.mxu0 %v587
      %732 = vmatpush1.bf16.msra.mxu0 %v586
      %733 = vmatprep.subr.bf16.mxu0 %v589
      %734 = vmatpush1.bf16.msra.mxu0 %v588
      %735 = vmatprep.subr.bf16.mxu0 %v591
      %736 = vmatpush1.bf16.msra.mxu0 %v590
      %737 = vmatprep.subr.bf16.mxu0 %v593
      %738 = vmatpush1.bf16.msra.mxu0 %v592
      %739 = vmatprep.subr.bf16.mxu0 0
      %740 = vmatpush1.bf16.msra.mxu0 0
      %741 = vmatprep.subr.bf16.mxu0 0
      %742 = vmatpush1.bf16.msra.mxu0 0
      %743 = vmatprep.subr.bf16.mxu0 0
      %744 = vmatpush1.bf16.msra.mxu0 0
      %745 = vmatprep.subr.bf16.mxu0 0
      %746 = vmatpush1.bf16.msra.mxu0 0
      %747 = vmatprep.subr.bf16.mxu0 0
      %748 = vmatpush1.bf16.msra.mxu0 0
      %749 = vmatprep.subr.bf16.mxu0 0
      %750 = vmatpush1.bf16.msra.mxu0 0
      %751 = vmatprep.subr.bf16.mxu0 0
      %752 = vmatpush1.bf16.msra.mxu0 0
      %753 = vmatprep.subr.bf16.mxu0 0
      %754 = vmatpush1.bf16.msra.mxu0 0
      %755 = vmatprep.mubr.bf16.mxu0 0
      %756 = vmatmul.mubr.bf16.gmra.mrb[0].mxu0 %v722
      %v757 = vpop.f32.mrb[0].mxu0
      %v758 = vadd.f32 %v720, %v757
      %v759 = vpop.f32.mrb[0].mxu0
      %v760 = vadd.f32 %v721, %v759
      %v761 = vpop.f32.mrb[0].mxu0
      %v762 = vpop.f32.mrb[0].mxu0
      %763 = vdwg.mxu0
      %v764 = vmax.f32 %v760, 0.0
      %vm765 = vcmp.ne.f32.partialorder %v760, %v760
      %v766 = vadd.f32 %v760, 0.0
      %v767 = vand.u32 2147483647, %v760
      %v768 = vsub.f32 0.0, %v767
      %v769 = vmul.f32 %v768, 1.442695
      %v770 = vpow.pop %v769
      %v771 = vadd.f32 %v770, 1.0
      %v772 = vlog2.pop %v771
      %v773 = vmul.f32 %v772, 0.6931472
      %v774 = vmul.f32 -0.5, %v770
      %v775 = vadd.f32 %v774, 1.0
      %v776 = vmul.f32 %v775, %v770
      %v777 = vand.u32 2147483647, %v770
      %vm778 = vcmp.lt.f32.partialorder %v777, 0.0004427343
      %v779 = vsel %vm778, %v776, %v773
      %v780 = vadd.f32 %v764, %v779
      %v781 = vsel %vm765, %v766, %v780
      %v782 = vadd.f32 %v781, 0.01
      %v783 = vrcp.pop %v782
      %v784 = vmul.f32 %v782, %v783
      %v785 = vsub.f32 2.0, %v784
      %v786 = vmul.f32 %v783, %v785
      %v787 = vsub.f32 0.0, %v686
      %v788 = vmul.f32 %v787, %v786
      %v789 = vtanh.pop %v758
      %v790 = vadd.f32 %v788, %v789
      %v791 = vmax.f32 %v790, -10.0
      %v792 = vmin.f32 %v791, 10.0
      %v793 = vmul.f32 %v792, 0.2
      %v794 = vadd.f32 %v686, %v793
      %s795 = sadd.s32 %s524, 1
      %p796 = scmp.lt.s32.totalorder %s795, 16
      %s797 = scalar_select %p796, 1, 0
      %v798 = vstv %s797
      %vm799 = vcmp.eq.s32.totalorder %v798, 1
      %v800 = vsel %vm799, %v794, %v686
      %v801 = vadd.f32 %v800, %v718
      %802 = vadd.xlane.f32.xlu0 %v801
      %v803 = vpop.xlane.xlu0 %802
      %v804 = vmul.f32 %v803, %v690
      %v805 = vmul.f32 %v801, %v801
      %806 = vadd.xlane.f32.xlu0 %v805
      %v807 = vpop.xlane.xlu0 %806
      %v808 = vmul.f32 %v807, %v690
      %v809 = vmul.f32 %v804, %v804
      %v810 = vsub.f32 %v808, %v809
      %v811 = vsub.f32 %v801, %v804
      %v812 = vadd.f32 %v810, 1e-05
      %v813 = vrsqrt.pop %v812
      %v814 = vmul.f32 %v811, %v813
      %v815 = vmul.f32 %v814, %v706
      %v816 = vadd.f32 %v815, %v713
      %s817 = scalar_lea.vmem %s305, 8
      %818 = vst [vmem:[%s817] sm:$0xff] %v816
      %s819 = scalar_lea.vmem %s299, 16
      %v820 = vld [vmem:[%s819] sm:$0xff]
      %s821 = scalar_lea.vmem [#allocation2], 32
      %v822 = vld [vmem:[%s821] sm:$0xff]
      %v823 = vld [vmem:[%s821 + $0x8] sm:$0xff]
      %v824 = vpack.c.bf16 %v800, %v800
      %825 = vmatprep.subr.bf16.mxu0 %v579
      %826 = vmatpush1.bf16.msra.mxu0 %v578
      %827 = vmatprep.subr.bf16.mxu0 %v581
      %828 = vmatpush1.bf16.msra.mxu0 %v580
      %829 = vmatprep.subr.bf16.mxu0 %v583
      %830 = vmatpush1.bf16.msra.mxu0 %v582
      %831 = vmatprep.subr.bf16.mxu0 %v585
      %832 = vmatpush1.bf16.msra.mxu0 %v584
      %833 = vmatprep.subr.bf16.mxu0 %v587
      %834 = vmatpush1.bf16.msra.mxu0 %v586
      %835 = vmatprep.subr.bf16.mxu0 %v589
      %836 = vmatpush1.bf16.msra.mxu0 %v588
      %837 = vmatprep.subr.bf16.mxu0 %v591
      %838 = vmatpush1.bf16.msra.mxu0 %v590
      %839 = vmatprep.subr.bf16.mxu0 %v593
      %840 = vmatpush1.bf16.msra.mxu0 %v592
      %841 = vmatprep.subr.bf16.mxu0 0
      %842 = vmatpush1.bf16.msra.mxu0 0
      %843 = vmatprep.subr.bf16.mxu0 0
      %844 = vmatpush1.bf16.msra.mxu0 0
      %845 = vmatprep.subr.bf16.mxu0 0
      %846 = vmatpush1.bf16.msra.mxu0 0
      %847 = vmatprep.subr.bf16.mxu0 0
      %848 = vmatpush1.bf16.msra.mxu0 0
      %849 = vmatprep.subr.bf16.mxu0 0
      %850 = vmatpush1.bf16.msra.mxu0 0
      %851 = vmatprep.subr.bf16.mxu0 0
      %852 = vmatpush1.bf16.msra.mxu0 0
      %853 = vmatprep.subr.bf16.mxu0 0
      %854 = vmatpush1.bf16.msra.mxu0 0
      %855 = vmatprep.subr.bf16.mxu0 0
      %856 = vmatpush1.bf16.msra.mxu0 0
      %857 = vmatprep.mubr.bf16.mxu0 0
      %858 = vmatmul.mubr.bf16.gmra.mrb[0].mxu0 %v824
      %v859 = vpop.f32.mrb[0].mxu0
      %v860 = vadd.f32 %v822, %v859
      %v861 = vpop.f32.mrb[0].mxu0
      %v862 = vadd.f32 %v823, %v861
      %v863 = vpop.f32.mrb[0].mxu0
      %v864 = vpop.f32.mrb[0].mxu0
      %865 = vdwg.mxu0
      %v866 = vmax.f32 %v862, 0.0
      %vm867 = vcmp.ne.f32.partialorder %v862, %v862
      %v868 = vadd.f32 %v862, 0.0
      %v869 = vand.u32 2147483647, %v862
      %v870 = vsub.f32 0.0, %v869
      %v871 = vmul.f32 %v870, 1.442695
      %v872 = vpow.pop %v871
      %v873 = vadd.f32 %v872, 1.0
      %v874 = vlog2.pop %v873
      %v875 = vmul.f32 %v874, 0.6931472
      %v876 = vmul.f32 -0.5, %v872
      %v877 = vadd.f32 %v876, 1.0
      %v878 = vmul.f32 %v877, %v872
      %v879 = vand.u32 2147483647, %v872
      %vm880 = vcmp.lt.f32.partialorder %v879, 0.0004427343
      %v881 = vsel %vm880, %v878, %v875
      %v882 = vadd.f32 %v866, %v881
      %v883 = vsel %vm867, %v868, %v882
      %v884 = vadd.f32 %v883, 0.01
      %v885 = vrcp.pop %v884
      %v886 = vmul.f32 %v884, %v885
      %v887 = vsub.f32 2.0, %v886
      %v888 = vmul.f32 %v885, %v887
      %v889 = vsub.f32 0.0, %v800
      %v890 = vmul.f32 %v889, %v888
      %v891 = vtanh.pop %v860
      %v892 = vadd.f32 %v890, %v891
      %v893 = vmax.f32 %v892, -10.0
      %v894 = vmin.f32 %v893, 10.0
      %v895 = vmul.f32 %v894, 0.2
      %v896 = vadd.f32 %v800, %v895
      %s897 = sadd.s32 %s524, 2
      %p898 = scmp.lt.s32.totalorder %s897, 16
      %s899 = scalar_select %p898, 1, 0
      %v900 = vstv %s899
      %vm901 = vcmp.eq.s32.totalorder %v900, 1
      %v902 = vsel %vm901, %v896, %v800
      %v903 = vadd.f32 %v902, %v820
      %904 = vadd.xlane.f32.xlu0 %v903
      %v905 = vpop.xlane.xlu0 %904
      %v906 = vmul.f32 %v905, %v690
      %v907 = vmul.f32 %v903, %v903
      %908 = vadd.xlane.f32.xlu0 %v907
      %v909 = vpop.xlane.xlu0 %908
      %v910 = vmul.f32 %v909, %v690
      %v911 = vmul.f32 %v906, %v906
      %v912 = vsub.f32 %v910, %v911
      %v913 = vsub.f32 %v903, %v906
      %v914 = vadd.f32 %v912, 1e-05
      %v915 = vrsqrt.pop %v914
      %v916 = vmul.f32 %v913, %v915
      %v917 = vmul.f32 %v916, %v706
      %v918 = vadd.f32 %v917, %v713
      %s919 = scalar_lea.vmem %s305, 16
      %920 = vst [vmem:[%s919] sm:$0xff] %v918
      %s921 = scalar_lea.vmem %s299, 24
      %v922 = vld [vmem:[%s921] sm:$0xff]
      %s923 = scalar_lea.vmem [#allocation2], 48
      %v924 = vld [vmem:[%s923] sm:$0xff]
      %v925 = vld [vmem:[%s923 + $0x8] sm:$0xff]
      %v926 = vpack.c.bf16 %v902, %v902
      %927 = vmatprep.subr.bf16.mxu0 %v579
      %928 = vmatpush1.bf16.msra.mxu0 %v578
      %929 = vmatprep.subr.bf16.mxu0 %v581
      %930 = vmatpush1.bf16.msra.mxu0 %v580
      %931 = vmatprep.subr.bf16.mxu0 %v583
      %932 = vmatpush1.bf16.msra.mxu0 %v582
      %933 = vmatprep.subr.bf16.mxu0 %v585
      %934 = vmatpush1.bf16.msra.mxu0 %v584
      %935 = vmatprep.subr.bf16.mxu0 %v587
      %936 = vmatpush1.bf16.msra.mxu0 %v586
      %937 = vmatprep.subr.bf16.mxu0 %v589
      %938 = vmatpush1.bf16.msra.mxu0 %v588
      %939 = vmatprep.subr.bf16.mxu0 %v591
      %940 = vmatpush1.bf16.msra.mxu0 %v590
      %941 = vmatprep.subr.bf16.mxu0 %v593
      %942 = vmatpush1.bf16.msra.mxu0 %v592
      %943 = vmatprep.subr.bf16.mxu0 0
      %944 = vmatpush1.bf16.msra.mxu0 0
      %945 = vmatprep.subr.bf16.mxu0 0
      %946 = vmatpush1.bf16.msra.mxu0 0
      %947 = vmatprep.subr.bf16.mxu0 0
      %948 = vmatpush1.bf16.msra.mxu0 0
      %949 = vmatprep.subr.bf16.mxu0 0
      %950 = vmatpush1.bf16.msra.mxu0 0
      %951 = vmatprep.subr.bf16.mxu0 0
      %952 = vmatpush1.bf16.msra.mxu0 0
      %953 = vmatprep.subr.bf16.mxu0 0
      %954 = vmatpush1.bf16.msra.mxu0 0
      %955 = vmatprep.subr.bf16.mxu0 0
      %956 = vmatpush1.bf16.msra.mxu0 0
      %957 = vmatprep.subr.bf16.mxu0 0
      %958 = vmatpush1.bf16.msra.mxu0 0
      %959 = vmatprep.mubr.bf16.mxu0 0
      %960 = vmatmul.mubr.bf16.gmra.mrb[0].mxu0 %v926
      %v961 = vpop.f32.mrb[0].mxu0
      %v962 = vadd.f32 %v924, %v961
      %v963 = vpop.f32.mrb[0].mxu0
      %v964 = vadd.f32 %v925, %v963
      %v965 = vpop.f32.mrb[0].mxu0
      %v966 = vpop.f32.mrb[0].mxu0
      %967 = vdwg.mxu0
      %v968 = vmax.f32 %v964, 0.0
      %vm969 = vcmp.ne.f32.partialorder %v964, %v964
      %v970 = vadd.f32 %v964, 0.0
      %v971 = vand.u32 2147483647, %v964
      %v972 = vsub.f32 0.0, %v971
      %v973 = vmul.f32 %v972, 1.442695
      %v974 = vpow.pop %v973
      %v975 = vadd.f32 %v974, 1.0
      %v976 = vlog2.pop %v975
      %v977 = vmul.f32 %v976, 0.6931472
      %v978 = vmul.f32 -0.5, %v974
      %v979 = vadd.f32 %v978, 1.0
      %v980 = vmul.f32 %v979, %v974
      %v981 = vand.u32 2147483647, %v974
      %vm982 = vcmp.lt.f32.partialorder %v981, 0.0004427343
      %v983 = vsel %vm982, %v980, %v977
      %v984 = vadd.f32 %v968, %v983
      %v985 = vsel %vm969, %v970, %v984
      %v986 = vadd.f32 %v985, 0.01
      %v987 = vrcp.pop %v986
      %v988 = vmul.f32 %v986, %v987
      %v989 = vsub.f32 2.0, %v988
      %v990 = vmul.f32 %v987, %v989
      %v991 = vsub.f32 0.0, %v902
      %v992 = vmul.f32 %v991, %v990
      %v993 = vtanh.pop %v962
      %v994 = vadd.f32 %v992, %v993
      %v995 = vmax.f32 %v994, -10.0
      %v996 = vmin.f32 %v995, 10.0
      %v997 = vmul.f32 %v996, 0.2
      %v998 = vadd.f32 %v902, %v997
      %s999 = sadd.s32 %s524, 3
      %p1000 = scmp.lt.s32.totalorder %s999, 16
      %s1001 = scalar_select %p1000, 1, 0
      %v1002 = vstv %s1001
      %vm1003 = vcmp.eq.s32.totalorder %v1002, 1
      %v1004 = vsel %vm1003, %v998, %v902
      %v1005 = vadd.f32 %v1004, %v922
      %1006 = vadd.xlane.f32.xlu0 %v1005
      %v1007 = vpop.xlane.xlu0 %1006
      %v1008 = vmul.f32 %v1007, %v690
      %v1009 = vmul.f32 %v1005, %v1005
      %1010 = vadd.xlane.f32.xlu0 %v1009
      %v1011 = vpop.xlane.xlu0 %1010
      %v1012 = vmul.f32 %v1011, %v690
      %v1013 = vmul.f32 %v1008, %v1008
      %v1014 = vsub.f32 %v1012, %v1013
      %v1015 = vsub.f32 %v1005, %v1008
      %v1016 = vadd.f32 %v1014, 1e-05
      %v1017 = vrsqrt.pop %v1016
      %v1018 = vmul.f32 %v1015, %v1017
      %v1019 = vmul.f32 %v1018, %v706
      %v1020 = vadd.f32 %v1019, %v713
      %s1021 = scalar_lea.vmem %s305, 24
      %1022 = vst [vmem:[%s1021] sm:$0xff] %v1020
      %s1023 = scalar_lea.vmem %s299, 32
      %v1024 = vld [vmem:[%s1023] sm:$0xff]
      %s1025 = scalar_lea.vmem [#allocation2], 64
      %v1026 = vld [vmem:[%s1025] sm:$0xff]
      %v1027 = vld [vmem:[%s1025 + $0x8] sm:$0xff]
      %v1028 = vpack.c.bf16 %v1004, %v1004
      %1029 = vmatprep.subr.bf16.mxu0 %v579
      %1030 = vmatpush1.bf16.msra.mxu0 %v578
      %1031 = vmatprep.subr.bf16.mxu0 %v581
      %1032 = vmatpush1.bf16.msra.mxu0 %v580
      %1033 = vmatprep.subr.bf16.mxu0 %v583
      %1034 = vmatpush1.bf16.msra.mxu0 %v582
      %1035 = vmatprep.subr.bf16.mxu0 %v585
      %1036 = vmatpush1.bf16.msra.mxu0 %v584
      %1037 = vmatprep.subr.bf16.mxu0 %v587
      %1038 = vmatpush1.bf16.msra.mxu0 %v586
      %1039 = vmatprep.subr.bf16.mxu0 %v589
      %1040 = vmatpush1.bf16.msra.mxu0 %v588
      %1041 = vmatprep.subr.bf16.mxu0 %v591
      %1042 = vmatpush1.bf16.msra.mxu0 %v590
      %1043 = vmatprep.subr.bf16.mxu0 %v593
      %1044 = vmatpush1.bf16.msra.mxu0 %v592
      %1045 = vmatprep.subr.bf16.mxu0 0
      %1046 = vmatpush1.bf16.msra.mxu0 0
      %1047 = vmatprep.subr.bf16.mxu0 0
      %1048 = vmatpush1.bf16.msra.mxu0 0
      %1049 = vmatprep.subr.bf16.mxu0 0
      %1050 = vmatpush1.bf16.msra.mxu0 0
      %1051 = vmatprep.subr.bf16.mxu0 0
      %1052 = vmatpush1.bf16.msra.mxu0 0
      %1053 = vmatprep.subr.bf16.mxu0 0
      %1054 = vmatpush1.bf16.msra.mxu0 0
      %1055 = vmatprep.subr.bf16.mxu0 0
      %1056 = vmatpush1.bf16.msra.mxu0 0
      %1057 = vmatprep.subr.bf16.mxu0 0
      %1058 = vmatpush1.bf16.msra.mxu0 0
      %1059 = vmatprep.subr.bf16.mxu0 0
      %1060 = vmatpush1.bf16.msra.mxu0 0
      %1061 = vmatprep.mubr.bf16.mxu0 0
      %1062 = vmatmul.mubr.bf16.gmra.mrb[0].mxu0 %v1028
      %v1063 = vpop.f32.mrb[0].mxu0
      %v1064 = vadd.f32 %v1026, %v1063
      %v1065 = vpop.f32.mrb[0].mxu0
      %v1066 = vadd.f32 %v1027, %v1065
      %v1067 = vpop.f32.mrb[0].mxu0
      %v1068 = vpop.f32.mrb[0].mxu0
      %1069 = vdwg.mxu0
      %v1070 = vmax.f32 %v1066, 0.0
      %vm1071 = vcmp.ne.f32.partialorder %v1066, %v1066
      %v1072 = vadd.f32 %v1066, 0.0
      %v1073 = vand.u32 2147483647, %v1066
      %v1074 = vsub.f32 0.0, %v1073
      %v1075 = vmul.f32 %v1074, 1.442695
      %v1076 = vpow.pop %v1075
      %v1077 = vadd.f32 %v1076, 1.0
      %v1078 = vlog2.pop %v1077
      %v1079 = vmul.f32 %v1078, 0.6931472
      %v1080 = vmul.f32 -0.5, %v1076
      %v1081 = vadd.f32 %v1080, 1.0
      %v1082 = vmul.f32 %v1081, %v1076
      %v1083 = vand.u32 2147483647, %v1076
      %vm1084 = vcmp.lt.f32.partialorder %v1083, 0.0004427343
      %v1085 = vsel %vm1084, %v1082, %v1079
      %v1086 = vadd.f32 %v1070, %v1085
      %v1087 = vsel %vm1071, %v1072, %v1086
      %v1088 = vadd.f32 %v1087, 0.01
      %v1089 = vrcp.pop %v1088
      %v1090 = vmul.f32 %v1088, %v1089
      %v1091 = vsub.f32 2.0, %v1090
      %v1092 = vmul.f32 %v1089, %v1091
      %v1093 = vsub.f32 0.0, %v1004
      %v1094 = vmul.f32 %v1093, %v1092
      %v1095 = vtanh.pop %v1064
      %v1096 = vadd.f32 %v1094, %v1095
      %v1097 = vmax.f32 %v1096, -10.0
      %v1098 = vmin.f32 %v1097, 10.0
      %v1099 = vmul.f32 %v1098, 0.2
      %v1100 = vadd.f32 %v1004, %v1099
      %s1101 = sadd.s32 %s524, 4
      %p1102 = scmp.lt.s32.totalorder %s1101, 16
      %s1103 = scalar_select %p1102, 1, 0
      %v1104 = vstv %s1103
      %vm1105 = vcmp.eq.s32.totalorder %v1104, 1
      %v1106 = vsel %vm1105, %v1100, %v1004
      %v1107 = vadd.f32 %v1106, %v1024
      %1108 = vadd.xlane.f32.xlu0 %v1107
      %v1109 = vpop.xlane.xlu0 %1108
      %v1110 = vmul.f32 %v1109, %v690
      %v1111 = vmul.f32 %v1107, %v1107
      %1112 = vadd.xlane.f32.xlu0 %v1111
      %v1113 = vpop.xlane.xlu0 %1112
      %v1114 = vmul.f32 %v1113, %v690
      %v1115 = vmul.f32 %v1110, %v1110
      %v1116 = vsub.f32 %v1114, %v1115
      %v1117 = vsub.f32 %v1107, %v1110
      %v1118 = vadd.f32 %v1116, 1e-05
      %v1119 = vrsqrt.pop %v1118
      %v1120 = vmul.f32 %v1117, %v1119
      %v1121 = vmul.f32 %v1120, %v706
      %v1122 = vadd.f32 %v1121, %v713
      %s1123 = scalar_lea.vmem %s305, 32
      %1124 = vst [vmem:[%s1123] sm:$0xff] %v1122
      %s1125 = scalar_lea.vmem %s299, 40
      %v1126 = vld [vmem:[%s1125] sm:$0xff]
      %s1127 = scalar_lea.vmem [#allocation2], 80
      %v1128 = vld [vmem:[%s1127] sm:$0xff]
      %v1129 = vld [vmem:[%s1127 + $0x8] sm:$0xff]
      %v1130 = vpack.c.bf16 %v1106, %v1106
      %1131 = vmatprep.subr.bf16.mxu0 %v579
      %1132 = vmatpush1.bf16.msra.mxu0 %v578
      %1133 = vmatprep.subr.bf16.mxu0 %v581
      %1134 = vmatpush1.bf16.msra.mxu0 %v580
      %1135 = vmatprep.subr.bf16.mxu0 %v583
      %1136 = vmatpush1.bf16.msra.mxu0 %v582
      %1137 = vmatprep.subr.bf16.mxu0 %v585
      %1138 = vmatpush1.bf16.msra.mxu0 %v584
      %1139 = vmatprep.subr.bf16.mxu0 %v587
      %1140 = vmatpush1.bf16.msra.mxu0 %v586
      %1141 = vmatprep.subr.bf16.mxu0 %v589
      %1142 = vmatpush1.bf16.msra.mxu0 %v588
      %1143 = vmatprep.subr.bf16.mxu0 %v591
      %1144 = vmatpush1.bf16.msra.mxu0 %v590
      %1145 = vmatprep.subr.bf16.mxu0 %v593
      %1146 = vmatpush1.bf16.msra.mxu0 %v592
      %1147 = vmatprep.subr.bf16.mxu0 0
      %1148 = vmatpush1.bf16.msra.mxu0 0
      %1149 = vmatprep.subr.bf16.mxu0 0
      %1150 = vmatpush1.bf16.msra.mxu0 0
      %1151 = vmatprep.subr.bf16.mxu0 0
      %1152 = vmatpush1.bf16.msra.mxu0 0
      %1153 = vmatprep.subr.bf16.mxu0 0
      %1154 = vmatpush1.bf16.msra.mxu0 0
      %1155 = vmatprep.subr.bf16.mxu0 0
      %1156 = vmatpush1.bf16.msra.mxu0 0
      %1157 = vmatprep.subr.bf16.mxu0 0
      %1158 = vmatpush1.bf16.msra.mxu0 0
      %1159 = vmatprep.subr.bf16.mxu0 0
      %1160 = vmatpush1.bf16.msra.mxu0 0
      %1161 = vmatprep.subr.bf16.mxu0 0
      %1162 = vmatpush1.bf16.msra.mxu0 0
      %1163 = vmatprep.mubr.bf16.mxu0 0
      %1164 = vmatmul.mubr.bf16.gmra.mrb[0].mxu0 %v1130
      %v1165 = vpop.f32.mrb[0].mxu0
      %v1166 = vadd.f32 %v1128, %v1165
      %v1167 = vpop.f32.mrb[0].mxu0
      %v1168 = vadd.f32 %v1129, %v1167
      %v1169 = vpop.f32.mrb[0].mxu0
      %v1170 = vpop.f32.mrb[0].mxu0
      %1171 = vdwg.mxu0
      %v1172 = vmax.f32 %v1168, 0.0
      %vm1173 = vcmp.ne.f32.partialorder %v1168, %v1168
      %v1174 = vadd.f32 %v1168, 0.0
      %v1175 = vand.u32 2147483647, %v1168
      %v1176 = vsub.f32 0.0, %v1175
      %v1177 = vmul.f32 %v1176, 1.442695
      %v1178 = vpow.pop %v1177
      %v1179 = vadd.f32 %v1178, 1.0
      %v1180 = vlog2.pop %v1179
      %v1181 = vmul.f32 %v1180, 0.6931472
      %v1182 = vmul.f32 -0.5, %v1178
      %v1183 = vadd.f32 %v1182, 1.0
      %v1184 = vmul.f32 %v1183, %v1178
      %v1185 = vand.u32 2147483647, %v1178
      %vm1186 = vcmp.lt.f32.partialorder %v1185, 0.0004427343
      %v1187 = vsel %vm1186, %v1184, %v1181
      %v1188 = vadd.f32 %v1172, %v1187
      %v1189 = vsel %vm1173, %v1174, %v1188
      %v1190 = vadd.f32 %v1189, 0.01
      %v1191 = vrcp.pop %v1190
      %v1192 = vmul.f32 %v1190, %v1191
      %v1193 = vsub.f32 2.0, %v1192
      %v1194 = vmul.f32 %v1191, %v1193
      %v1195 = vsub.f32 0.0, %v1106
      %v1196 = vmul.f32 %v1195, %v1194
      %v1197 = vtanh.pop %v1166
      %v1198 = vadd.f32 %v1196, %v1197
      %v1199 = vmax.f32 %v1198, -10.0
      %v1200 = vmin.f32 %v1199, 10.0
      %v1201 = vmul.f32 %v1200, 0.2
      %v1202 = vadd.f32 %v1106, %v1201
      %s1203 = sadd.s32 %s524, 5
      %p1204 = scmp.lt.s32.totalorder %s1203, 16
      %s1205 = scalar_select %p1204, 1, 0
      %v1206 = vstv %s1205
      %vm1207 = vcmp.eq.s32.totalorder %v1206, 1
      %v1208 = vsel %vm1207, %v1202, %v1106
      %v1209 = vadd.f32 %v1208, %v1126
      %1210 = vadd.xlane.f32.xlu0 %v1209
      %v1211 = vpop.xlane.xlu0 %1210
      %v1212 = vmul.f32 %v1211, %v690
      %v1213 = vmul.f32 %v1209, %v1209
      %1214 = vadd.xlane.f32.xlu0 %v1213
      %v1215 = vpop.xlane.xlu0 %1214
      %v1216 = vmul.f32 %v1215, %v690
      %v1217 = vmul.f32 %v1212, %v1212
      %v1218 = vsub.f32 %v1216, %v1217
      %v1219 = vsub.f32 %v1209, %v1212
      %v1220 = vadd.f32 %v1218, 1e-05
      %v1221 = vrsqrt.pop %v1220
      %v1222 = vmul.f32 %v1219, %v1221
      %v1223 = vmul.f32 %v1222, %v706
      %v1224 = vadd.f32 %v1223, %v713
      %s1225 = scalar_lea.vmem %s305, 40
      %1226 = vst [vmem:[%s1225] sm:$0xff] %v1224
      %1227 = vst [vmem:[%s8] sm:$0xff] %v1208
      %s1228 = smul.u32 6, %s20
      %p1229 = scmp.lt.s32.totalorder %s1228, 17
      %s1230 = scalar_select %p1229, %s1228, 17
      %s1231 = smul.addr %s1230, 8
      %s1232 = scalar_lea.vmem %s7, %s1231
      // Predicated region
      $region53: #{lnn_block_forward.1} parent=47 // pred_check
        %p1233 = pneg %p190
      $region54: #{lnn_block_forward.1} parent=47 // pred_check_branch
        %1235 = sbr.rel (%p1233) target = $region56
      $region55: #{lnn_block_forward.1} parent=47 // pred_region
        %s1236 = smul.u32 6, %s20
      $region56: #{lnn_block_forward.1} parent=47 // pred_fallthru
        _
      // Predicated region
      $region57: #{lnn_block_forward.1} parent=47 // pred_check
        %p1237 = pneg %p211
      $region58: #{lnn_block_forward.1} parent=47 // pred_check_branch
        %1239 = sbr.rel (%p1237) target = $region60
      $region59: #{lnn_block_forward.1} parent=47 // pred_region
        _
      $region60: #{lnn_block_forward.1} parent=47 // pred_fallthru
        _
      // Predicated region
      $region61: #{lnn_block_forward.1} parent=47 // pred_check
        %p1240 = pneg %p211
      $region62: #{lnn_block_forward.1} parent=47 // pred_check_branch
        %1242 = sbr.rel (%p1240) target = $region64
      $region63: #{lnn_block_forward.1} parent=47 // pred_region
        _
      $region64: #{lnn_block_forward.1} parent=47 // pred_fallthru
        _
    $region48: #{lnn_block_forward.1} parent=5 // pred_fallthru
      _
    %p1243 = scmp.le.s32.totalorder 2, %s15
    // Predicated region
    $region65: #{lnn_block_forward.1} parent=5 // pred_check
      %p1244 = pneg %p1243
    $region66: #{lnn_block_forward.1} parent=5 // pred_check_branch
      %1246 = sbr.rel (%p1244) target = $region68
    $region67: #{lnn_block_forward.1} parent=5 // pred_region
      %s1247 = ssub.s32 %s15, 2
      // Predicated region
      $region69: #{lnn_block_forward.1} parent=67 // pred_check
        %p1248 = pneg %p196
      $region70: #{lnn_block_forward.1} parent=67 // pred_check_branch
        %1250 = sbr.rel (%p1248) target = $region72
      $region71: #{lnn_block_forward.1} parent=67 // pred_region
        %s1251 = smul.u32 6, %s21
        %p1252 = scmp.lt.s32.totalorder %s1251, 17
        %s1253 = scalar_select %p1252, %s1251, 17
        %s1254 = smul.addr %s1253, 8
        %s1255 = scalar_lea.vmem %s7, %s1254
      $region72: #{lnn_block_forward.1} parent=67 // pred_fallthru
        _
    $region68: #{lnn_block_forward.1} parent=5 // pred_fallthru
      _
  $region6: #{lnn_block_forward.1} parent=0 // loop_footer
    %s19 = sadd.s32 1, %s15
  $region7: #{lnn_block_forward.1} parent=0 // loop_footer_branch
    %14 = sbr.rel target = $region3
  $region8: #{lnn_block_forward.1} parent=0 // loop_exit
    _

</llo_original>
